<compile_context>
chip_gen: v7x
topology: tpu7x:2x2x1
jax: 0.10.0
libtpu: 0.0.40
codegen_flags: <defaults>
</compile_context>

<pallas_src>
import jax
import jax.numpy as jnp
from jax.experimental import pallas as pl
from jax.experimental.pallas import tpu as pltpu


def _mlp_kernel(x_ref,
                w1_ref, b1_ref,
                w2_ref, b2_ref,
                w3_ref, b3_ref,
                w4_ref, b4_ref,
                w5_ref, b5_ref,
                o_ref):
    bf16 = jnp.bfloat16
    f32 = jnp.float32

    def dense_relu(h, w_ref, b_ref):
        h = jnp.dot(h.astype(bf16), w_ref[...],
                    preferred_element_type=f32) + b_ref[...]
        return jnp.maximum(h, 0.0)

    h = dense_relu(x_ref[...], w1_ref, b1_ref)   # (tb, 16d)
    h = dense_relu(h, w2_ref, b2_ref)            # (tb, 32d)
    h = dense_relu(h, w3_ref, b3_ref)            # (tb, 64d)
    h = dense_relu(h, w4_ref, b4_ref)            # (tb, 32d)

    # Final (32d -> 1) layer: VPU multiply + lane reduction instead of an
    # N=1 MXU matmul; stored lane-dense as a (1, 1, tb) row.
    out_row = jnp.sum(h * w5_ref[...], axis=-1)          # (tb,)
    out_row = out_row.reshape(o_ref.shape) + b5_ref[...]  # broadcast (1, 1)
    o_ref[...] = out_row.astype(o_ref.dtype)


_MAX_BATCH_TILE = 2048


def _round_up(x, m):
    return -(-x // m) * m


def _pick_batch_tile(batch, d, act_budget_bytes):
    """Largest MXU-friendly batch tile whose activation working set fits VMEM."""
    b8 = _round_up(max(batch, 1), 8)
    # Per-row VMEM: f32 + bf16 copies of the 16d/32d/64d/32d activations,
    # double-buffered f32 input row of width d, plus the f32 output element.
    per_row = (16 + 32 + 64 + 32) * d * (4 + 2) + 2 * d * 4 + 8
    cap = (act_budget_bytes // max(per_row, 1)) // 8 * 8
    cap = max(128, min(_MAX_BATCH_TILE, cap))
    if b8 <= 256:
        return b8                      # one small tile; grid overhead paid once
    if b8 <= 2 * cap:
        # Exactly two tiles: lets the "parallel" batch axis shard across the
        # two TensorCores on v7x; on v5e/v6e it only adds one ~0.35us step.
        return _round_up(b8 // 2, 8)
    return cap


def discrete_f_network_forward(state, preference, params, *, batch_tile=None):
    """Pallas TPU implementation of Discrete_F_Network.forward."""
    (w1, b1), (w2, b2), (w3, b3), (w4, b4), (w5, b5) = params

    B, n_in = state.shape
    n_pref = preference.shape[1]
    d = n_in + n_pref
    assert w1.shape == (d, 16 * d), (w1.shape, d)

    f32 = jnp.float32
    bf16 = jnp.bfloat16

    # Single K=d layer-1 matmul: concatenate once in the wrapper.
    x = jnp.concatenate([state, preference], axis=1).astype(f32)

    # bf16 weights for the MXU path; the last (N=1) layer stays f32 as a
    # broadcast row for the VPU.
    w1b, w2b, w3b, w4b = (w.astype(bf16) for w in (w1, w2, w3, w4))
    b1f, b2f, b3f, b4f = (b.reshape(1, -1).astype(f32) for b in (b1, b2, b3, b4))
    w5_row = w5.reshape(1, -1).astype(f32)
    b5f = b5.reshape(1, 1).astype(f32)

    # --- VMEM budget -------------------------------------------------------
    try:
        phys_vmem = int(pltpu.get_tpu_info().vmem_capacity_bytes)
    except Exception:
        phys_vmem = 64 << 20            # v7x per-TC VMEM (most restrictive gen)
    vmem_cap = min(int(phys_vmem * 0.85), 100 << 20)

    weight_bytes = sum(int(w.size) * 2 for w in (w1b, w2b, w3b, w4b))  # 1-buffered bf16
    small_bytes = sum(int(a.size) * 4 for a in (b1f, b2f, b3f, b4f, w5_row, b5f))
    headroom = 6 << 20                  # compiler scratch / spill headroom
    act_budget = max(8 << 20, vmem_cap - weight_bytes - small_bytes - headroom)
    # TODO(synk): if weight_bytes alone exceeds vmem_cap (very large d,
    # especially on v7x's 64 MiB VMEM), K/N-tile the 32d x 64d and 64d x 32d
    # layers with a nested pltpu.emit_pipeline instead of keeping them resident.

    tb = batch_tile if batch_tile is not None else _pick_batch_tile(B, d, act_budget)
    n_tiles = -(-B // tb)
    B_pad = n_tiles * tb
    if B_pad != B:
        x = jnp.pad(x, ((0, B_pad - B), (0, 0)))

    vmem_est = (weight_bytes + small_bytes
                + 2 * (tb * d * 4 + tb * 4)            # double-buffered I/O tiles
                + tb * (16 + 32 + 64 + 32) * d * 6     # f32 + bf16 activations
                + headroom)
    vmem_limit = int(min(max(vmem_est, 16 << 20), vmem_cap))

    flops = 2 * B_pad * d * d * (16 + 16 * 32 + 32 * 64 + 64 * 32) + 2 * B_pad * 32 * d
    bytes_accessed = B_pad * (d + 1) * 4 + weight_bytes + small_bytes

    def make_call(single_buffer_weights):
        def resident(arr):
            # Constant index_map => never re-DMA'd; Buffered(1) avoids the
            # default second VMEM copy of every resident weight/bias.
            if single_buffer_weights:
                return pl.BlockSpec(arr.shape, lambda i: (0, 0),
                                    pipeline_mode=pl.Buffered(1))
            return pl.BlockSpec(arr.shape, lambda i: (0, 0))

        return pl.pallas_call(
            _mlp_kernel,
            out_shape=jax.ShapeDtypeStruct((n_tiles, 1, tb), f32),
            grid=(n_tiles,),
            in_specs=[
                pl.BlockSpec((tb, d), lambda i: (i, 0)),   # input batch tile
                resident(w1b), resident(b1f),
                resident(w2b), resident(b2f),
                resident(w3b), resident(b3f),
                resident(w4b), resident(b4f),
                resident(w5_row), resident(b5f),
            ],
            out_specs=pl.BlockSpec((1, 1, tb), lambda i: (i, 0, 0)),
            compiler_params=pltpu.CompilerParams(
                dimension_semantics=("parallel",),
                vmem_limit_bytes=vmem_limit),
            cost_estimate=pl.CostEstimate(
                flops=int(flops), transcendentals=0,
                bytes_accessed=int(bytes_accessed)),
        )

    args = (x, w1b, b1f, w2b, b2f, w3b, b3f, w4b, b4f, w5_row, b5f)
    try:
        out = make_call(True)(*args)
    except Exception:
        # Fallback for jax versions without BlockSpec(pipeline_mode=...):
        # identical kernel, default double-buffered resident weights.
        out = make_call(False)(*args)

    return out.reshape(B_pad, 1)[:B]


def init_params(key, num_inputs, num_preferences):
    """Deterministic Xavier-uniform weights, zero biases (weights_init_)."""
    d = num_inputs + num_preferences
    dims = [d, d * 16, d * 32, d * 64, d * 32, 1]
    params = []
    for idx in range(len(dims) - 1):
        fan_in, fan_out = dims[idx], dims[idx + 1]
        key, sub = jax.random.split(key)
        limit = (6.0 / (fan_in + fan_out)) ** 0.5
        w = jax.random.uniform(sub, (fan_in, fan_out), jnp.float32,
                               minval=-limit, maxval=limit)
        b = jnp.zeros((1, fan_out), jnp.float32)
        params.append((w, b))
    return params


def reference_forward(state, preference, params):
    """Pure-JAX reference mirroring the kernel's bf16-in / f32-accumulate math."""
    x = jnp.concatenate([state, preference], axis=1).astype(jnp.float32)
    n = len(params)
    for i, (w, b) in enumerate(params):
        if i < n - 1:
            x = jnp.dot(x.astype(jnp.bfloat16), w.astype(jnp.bfloat16),
                        preferred_element_type=jnp.float32) + b.reshape(1, -1)
            x = jnp.maximum(x, 0.0)
        else:
            x = (jnp.sum(x * w.reshape(1, -1), axis=-1, keepdims=True)
                 + b.reshape(1, 1))
    return x


if __name__ == "__main__":
    num_inputs = 4
    num_preferences = 4
    batch = 8

    key = jax.random.PRNGKey(0)
    k_params, k_state, k_pref = jax.random.split(key, 3)

    params = init_params(k_params, num_inputs, num_preferences)
    state = jax.random.normal(k_state, (batch, num_inputs), jnp.float32)
    preference = jax.random.normal(k_pref, (batch, num_preferences), jnp.float32)

    out = discrete_f_network_forward(state, preference, params)
    out = jax.block_until_ready(out)

    ref = reference_forward(state, preference, params)
    assert out.shape == (batch, 1), out.shape
    assert jnp.allclose(out, ref, atol=2e-2, rtol=2e-2), "mismatch vs reference"

    print("KERNEL_OK")
</pallas_src>

<mosaic_0001>
module attributes {stable_mosaic.version = 11 : i64} {
  func.func @_mlp_kernel(%arg0: i32, %arg1: memref<8x8xf32, #tpu.memory_space<vmem>>, %arg2: memref<8x128xbf16, #tpu.memory_space<vmem>>, %arg3: memref<1x128xf32, #tpu.memory_space<vmem>>, %arg4: memref<128x256xbf16, #tpu.memory_space<vmem>>, %arg5: memref<1x256xf32, #tpu.memory_space<vmem>>, %arg6: memref<256x512xbf16, #tpu.memory_space<vmem>>, %arg7: memref<1x512xf32, #tpu.memory_space<vmem>>, %arg8: memref<512x256xbf16, #tpu.memory_space<vmem>>, %arg9: memref<1x256xf32, #tpu.memory_space<vmem>>, %arg10: memref<1x256xf32, #tpu.memory_space<vmem>>, %arg11: memref<1x1xf32, #tpu.memory_space<vmem>>, %arg12: memref<1x1x8xf32, #tpu.memory_space<vmem>>) attributes {dimension_semantics = [#tpu.dimension_semantics<parallel>], iteration_bounds = array<i64: 1>, scalar_prefetch = 0 : i64, scratch_operands = 0 : i64, tpu.core_type = #tpu.core_type<tc>, window_params = [{transform_indices = @transform_0, window_bounds = array<i64: 8, 8>}, {pipeline_mode = #tpu.pipeline_mode<synchronous>, transform_indices = @transform_1, window_bounds = array<i64: 8, 128>}, {pipeline_mode = #tpu.pipeline_mode<synchronous>, transform_indices = @transform_2, window_bounds = array<i64: 1, 128>}, {pipeline_mode = #tpu.pipeline_mode<synchronous>, transform_indices = @transform_3, window_bounds = array<i64: 128, 256>}, {pipeline_mode = #tpu.pipeline_mode<synchronous>, transform_indices = @transform_4, window_bounds = array<i64: 1, 256>}, {pipeline_mode = #tpu.pipeline_mode<synchronous>, transform_indices = @transform_5, window_bounds = array<i64: 256, 512>}, {pipeline_mode = #tpu.pipeline_mode<synchronous>, transform_indices = @transform_6, window_bounds = array<i64: 1, 512>}, {pipeline_mode = #tpu.pipeline_mode<synchronous>, transform_indices = @transform_7, window_bounds = array<i64: 512, 256>}, {pipeline_mode = #tpu.pipeline_mode<synchronous>, transform_indices = @transform_8, window_bounds = array<i64: 1, 256>}, {pipeline_mode = #tpu.pipeline_mode<synchronous>, transform_indices = @transform_9, window_bounds = array<i64: 1, 256>}, {pipeline_mode = #tpu.pipeline_mode<synchronous>, transform_indices = @transform_10, window_bounds = array<i64: 1, 1>}, {transform_indices = @transform_11, window_bounds = array<i64: 1, 1, 8>}]} {
    %c0 = arith.constant 0 : index
    %c0_0 = arith.constant 0 : index
    %0 = vector.load %arg1[%c0, %c0_0] : memref<8x8xf32, #tpu.memory_space<vmem>>, vector<8x8xf32>
    %1 = arith.truncf %0 : vector<8x8xf32> to vector<8x8xbf16>
    %c0_1 = arith.constant 0 : index
    %c0_2 = arith.constant 0 : index
    %2 = vector.load %arg2[%c0_1, %c0_2] : memref<8x128xbf16, #tpu.memory_space<vmem>>, vector<8x128xbf16>
    %cst = arith.constant dense<0.000000e+00> : vector<8x128xf32>
    %3 = tpu.matmul %1, %2, %cst {dimension_numbers = #tpu.dot_dimension_numbers<[1], [0], [0], [1], [0, 0, 1, 1], [], []>} : vector<8x8xbf16>, vector<8x128xbf16>, vector<8x128xf32> -> vector<8x128xf32>
    %c0_3 = arith.constant 0 : index
    %c0_4 = arith.constant 0 : index
    %4 = vector.load %arg3[%c0_3, %c0_4] : memref<1x128xf32, #tpu.memory_space<vmem>>, vector<1x128xf32>
    %5 = vector.broadcast %4 : vector<1x128xf32> to vector<8x128xf32>
    %6 = arith.addf %3, %5 : vector<8x128xf32>
    %cst_5 = arith.constant 0.000000e+00 : f32
    %7 = vector.broadcast %cst_5 : f32 to vector<8x128xf32>
    %8 = arith.maximumf %6, %7 : vector<8x128xf32>
    %9 = arith.truncf %8 : vector<8x128xf32> to vector<8x128xbf16>
    %c0_6 = arith.constant 0 : index
    %c0_7 = arith.constant 0 : index
    %10 = vector.load %arg4[%c0_6, %c0_7] : memref<128x256xbf16, #tpu.memory_space<vmem>>, vector<128x256xbf16>
    %cst_8 = arith.constant dense<0.000000e+00> : vector<8x256xf32>
    %11 = tpu.matmul %9, %10, %cst_8 {dimension_numbers = #tpu.dot_dimension_numbers<[1], [0], [0], [1], [0, 0, 1, 1], [], []>} : vector<8x128xbf16>, vector<128x256xbf16>, vector<8x256xf32> -> vector<8x256xf32>
    %c0_9 = arith.constant 0 : index
    %c0_10 = arith.constant 0 : index
    %12 = vector.load %arg5[%c0_9, %c0_10] : memref<1x256xf32, #tpu.memory_space<vmem>>, vector<1x256xf32>
    %13 = vector.broadcast %12 : vector<1x256xf32> to vector<8x256xf32>
    %14 = arith.addf %11, %13 : vector<8x256xf32>
    %cst_11 = arith.constant 0.000000e+00 : f32
    %15 = vector.broadcast %cst_11 : f32 to vector<8x256xf32>
    %16 = arith.maximumf %14, %15 : vector<8x256xf32>
    %17 = arith.truncf %16 : vector<8x256xf32> to vector<8x256xbf16>
    %c0_12 = arith.constant 0 : index
    %c0_13 = arith.constant 0 : index
    %18 = vector.load %arg6[%c0_12, %c0_13] : memref<256x512xbf16, #tpu.memory_space<vmem>>, vector<256x512xbf16>
    %cst_14 = arith.constant dense<0.000000e+00> : vector<8x512xf32>
    %19 = tpu.matmul %17, %18, %cst_14 {dimension_numbers = #tpu.dot_dimension_numbers<[1], [0], [0], [1], [0, 0, 1, 1], [], []>} : vector<8x256xbf16>, vector<256x512xbf16>, vector<8x512xf32> -> vector<8x512xf32>
    %c0_15 = arith.constant 0 : index
    %c0_16 = arith.constant 0 : index
    %20 = vector.load %arg7[%c0_15, %c0_16] : memref<1x512xf32, #tpu.memory_space<vmem>>, vector<1x512xf32>
    %21 = vector.broadcast %20 : vector<1x512xf32> to vector<8x512xf32>
    %22 = arith.addf %19, %21 : vector<8x512xf32>
    %cst_17 = arith.constant 0.000000e+00 : f32
    %23 = vector.broadcast %cst_17 : f32 to vector<8x512xf32>
    %24 = arith.maximumf %22, %23 : vector<8x512xf32>
    %25 = arith.truncf %24 : vector<8x512xf32> to vector<8x512xbf16>
    %c0_18 = arith.constant 0 : index
    %c0_19 = arith.constant 0 : index
    %26 = vector.load %arg8[%c0_18, %c0_19] : memref<512x256xbf16, #tpu.memory_space<vmem>>, vector<512x256xbf16>
    %cst_20 = arith.constant dense<0.000000e+00> : vector<8x256xf32>
    %27 = tpu.matmul %25, %26, %cst_20 {dimension_numbers = #tpu.dot_dimension_numbers<[1], [0], [0], [1], [0, 0, 1, 1], [], []>} : vector<8x512xbf16>, vector<512x256xbf16>, vector<8x256xf32> -> vector<8x256xf32>
    %c0_21 = arith.constant 0 : index
    %c0_22 = arith.constant 0 : index
    %28 = vector.load %arg9[%c0_21, %c0_22] : memref<1x256xf32, #tpu.memory_space<vmem>>, vector<1x256xf32>
    %29 = vector.broadcast %28 : vector<1x256xf32> to vector<8x256xf32>
    %30 = arith.addf %27, %29 : vector<8x256xf32>
    %cst_23 = arith.constant 0.000000e+00 : f32
    %31 = vector.broadcast %cst_23 : f32 to vector<8x256xf32>
    %32 = arith.maximumf %30, %31 : vector<8x256xf32>
    %c0_24 = arith.constant 0 : index
    %c0_25 = arith.constant 0 : index
    %33 = vector.load %arg10[%c0_24, %c0_25] : memref<1x256xf32, #tpu.memory_space<vmem>>, vector<1x256xf32>
    %34 = vector.broadcast %33 : vector<1x256xf32> to vector<8x256xf32>
    %35 = arith.mulf %32, %34 : vector<8x256xf32>
    %cst_26 = arith.constant dense<0.000000e+00> : vector<8xf32>
    %36 = vector.multi_reduction <add>, %35, %cst_26 [1] : vector<8x256xf32> to vector<8xf32>
    %37 = vector.shape_cast %36 : vector<8xf32> to vector<1x1x8xf32>
    %c0_27 = arith.constant 0 : index
    %c0_28 = arith.constant 0 : index
    %38 = vector.load %arg11[%c0_27, %c0_28] : memref<1x1xf32, #tpu.memory_space<vmem>>, vector<1x1xf32>
    %39 = vector.shape_cast %38 : vector<1x1xf32> to vector<1x1x1xf32>
    %40 = vector.broadcast %39 : vector<1x1x1xf32> to vector<1x1x8xf32>
    %41 = arith.addf %37, %40 : vector<1x1x8xf32>
    %c0_29 = arith.constant 0 : index
    %c0_30 = arith.constant 0 : index
    %c0_31 = arith.constant 0 : index
    %42 = vector.load %arg12[%c0_29, %c0_30, %c0_31] : memref<1x1x8xf32, #tpu.memory_space<vmem>>, vector<1x1x8xf32>
    tpu.vector_store %arg12[%c0_29, %c0_30, %c0_31], %41 {strides = array<i32>} : memref<1x1x8xf32, #tpu.memory_space<vmem>>, vector<1x1x8xf32>,
    return
  }
  func.func @transform_0(%arg0: i32) -> (i32, i32) {
    %c0_i32 = arith.constant 0 : i32
    %c0_i32_0 = arith.constant 0 : i32
    return %arg0, %c0_i32 : i32, i32
  }
  func.func @transform_1(%arg0: i32) -> (i32, i32) {
    %c0_i32 = arith.constant 0 : i32
    %c0_i32_0 = arith.constant 0 : i32
    %c0_i32_1 = arith.constant 0 : i32
    return %c0_i32, %c0_i32_0 : i32, i32
  }
  func.func @transform_2(%arg0: i32) -> (i32, i32) {
    %c0_i32 = arith.constant 0 : i32
    %c0_i32_0 = arith.constant 0 : i32
    %c0_i32_1 = arith.constant 0 : i32
    return %c0_i32, %c0_i32_0 : i32, i32
  }
  func.func @transform_3(%arg0: i32) -> (i32, i32) {
    %c0_i32 = arith.constant 0 : i32
    %c0_i32_0 = arith.constant 0 : i32
    %c0_i32_1 = arith.constant 0 : i32
    return %c0_i32, %c0_i32_0 : i32, i32
  }
  func.func @transform_4(%arg0: i32) -> (i32, i32) {
    %c0_i32 = arith.constant 0 : i32
    %c0_i32_0 = arith.constant 0 : i32
    %c0_i32_1 = arith.constant 0 : i32
    return %c0_i32, %c0_i32_0 : i32, i32
  }
  func.func @transform_5(%arg0: i32) -> (i32, i32) {
    %c0_i32 = arith.constant 0 : i32
    %c0_i32_0 = arith.constant 0 : i32
    %c0_i32_1 = arith.constant 0 : i32
    return %c0_i32, %c0_i32_0 : i32, i32
  }
  func.func @transform_6(%arg0: i32) -> (i32, i32) {
    %c0_i32 = arith.constant 0 : i32
    %c0_i32_0 = arith.constant 0 : i32
    %c0_i32_1 = arith.constant 0 : i32
    return %c0_i32, %c0_i32_0 : i32, i32
  }
  func.func @transform_7(%arg0: i32) -> (i32, i32) {
    %c0_i32 = arith.constant 0 : i32
    %c0_i32_0 = arith.constant 0 : i32
    %c0_i32_1 = arith.constant 0 : i32
    return %c0_i32, %c0_i32_0 : i32, i32
  }
  func.func @transform_8(%arg0: i32) -> (i32, i32) {
    %c0_i32 = arith.constant 0 : i32
    %c0_i32_0 = arith.constant 0 : i32
    %c0_i32_1 = arith.constant 0 : i32
    return %c0_i32, %c0_i32_0 : i32, i32
  }
  func.func @transform_9(%arg0: i32) -> (i32, i32) {
    %c0_i32 = arith.constant 0 : i32
    %c0_i32_0 = arith.constant 0 : i32
    %c0_i32_1 = arith.constant 0 : i32
    return %c0_i32, %c0_i32_0 : i32, i32
  }
  func.func @transform_10(%arg0: i32) -> (i32, i32) {
    %c0_i32 = arith.constant 0 : i32
    %c0_i32_0 = arith.constant 0 : i32
    %c0_i32_1 = arith.constant 0 : i32
    return %c0_i32, %c0_i32_0 : i32, i32
  }
  func.func @transform_11(%arg0: i32) -> (i32, i32, i32) {
    %c0_i32 = arith.constant 0 : i32
    %c0_i32_0 = arith.constant 0 : i32
    %c0_i32_1 = arith.constant 0 : i32
    return %arg0, %c0_i32, %c0_i32_0 : i32, i32, i32
  }
}

module attributes {stable_mosaic.version = 11 : i64} {
  func.func @_mlp_kernel(%arg0: i32, %arg1: memref<8x8xf32, #tpu.memory_space<vmem>>, %arg2: memref<8x128xbf16, #tpu.memory_space<vmem>>, %arg3: memref<1x128xf32, #tpu.memory_space<vmem>>, %arg4: memref<128x256xbf16, #tpu.memory_space<vmem>>, %arg5: memref<1x256xf32, #tpu.memory_space<vmem>>, %arg6: memref<256x512xbf16, #tpu.memory_space<vmem>>, %arg7: memref<1x512xf32, #tpu.memory_space<vmem>>, %arg8: memref<512x256xbf16, #tpu.memory_space<vmem>>, %arg9: memref<1x256xf32, #tpu.memory_space<vmem>>, %arg10: memref<1x256xf32, #tpu.memory_space<vmem>>, %arg11: memref<1x1xf32, #tpu.memory_space<vmem>>, %arg12: memref<1x1x8xf32, #tpu.memory_space<vmem>>) attributes {dimension_semantics = [#tpu.dimension_semantics<parallel>], iteration_bounds = array<i64: 1>, scalar_prefetch = 0 : i64, scratch_operands = 0 : i64, tpu.core_type = #tpu.core_type<tc>, window_params = [{transform_indices = @transform_0, window_bounds = array<i64: 8, 8>}, {pipeline_mode = #tpu.pipeline_mode<synchronous>, transform_indices = @transform_1, window_bounds = array<i64: 8, 128>}, {pipeline_mode = #tpu.pipeline_mode<synchronous>, transform_indices = @transform_2, window_bounds = array<i64: 1, 128>}, {pipeline_mode = #tpu.pipeline_mode<synchronous>, transform_indices = @transform_3, window_bounds = array<i64: 128, 256>}, {pipeline_mode = #tpu.pipeline_mode<synchronous>, transform_indices = @transform_4, window_bounds = array<i64: 1, 256>}, {pipeline_mode = #tpu.pipeline_mode<synchronous>, transform_indices = @transform_5, window_bounds = array<i64: 256, 512>}, {pipeline_mode = #tpu.pipeline_mode<synchronous>, transform_indices = @transform_6, window_bounds = array<i64: 1, 512>}, {pipeline_mode = #tpu.pipeline_mode<synchronous>, transform_indices = @transform_7, window_bounds = array<i64: 512, 256>}, {pipeline_mode = #tpu.pipeline_mode<synchronous>, transform_indices = @transform_8, window_bounds = array<i64: 1, 256>}, {pipeline_mode = #tpu.pipeline_mode<synchronous>, transform_indices = @transform_9, window_bounds = array<i64: 1, 256>}, {pipeline_mode = #tpu.pipeline_mode<synchronous>, transform_indices = @transform_10, window_bounds = array<i64: 1, 1>}, {transform_indices = @transform_11, window_bounds = array<i64: 1, 1, 8>}]} {
    %c0 = arith.constant 0 : index
    %c0_0 = arith.constant 0 : index
    %0 = vector.load %arg1[%c0, %c0_0] : memref<8x8xf32, #tpu.memory_space<vmem>>, vector<8x8xf32>
    %1 = arith.truncf %0 : vector<8x8xf32> to vector<8x8xbf16>
    %c0_1 = arith.constant 0 : index
    %c0_2 = arith.constant 0 : index
    %2 = vector.load %arg2[%c0_1, %c0_2] : memref<8x128xbf16, #tpu.memory_space<vmem>>, vector<8x128xbf16>
    %cst = arith.constant dense<0.000000e+00> : vector<8x128xf32>
    %3 = tpu.matmul %1, %2, %cst {dimension_numbers = #tpu.dot_dimension_numbers<[1], [0], [0], [1], [0, 0, 1, 1], [], []>} : vector<8x8xbf16>, vector<8x128xbf16>, vector<8x128xf32> -> vector<8x128xf32>
    %c0_3 = arith.constant 0 : index
    %c0_4 = arith.constant 0 : index
    %4 = vector.load %arg3[%c0_3, %c0_4] : memref<1x128xf32, #tpu.memory_space<vmem>>, vector<1x128xf32>
    %5 = vector.broadcast %4 : vector<1x128xf32> to vector<8x128xf32>
    %6 = arith.addf %3, %5 : vector<8x128xf32>
    %cst_5 = arith.constant 0.000000e+00 : f32
    %7 = vector.broadcast %cst_5 : f32 to vector<8x128xf32>
    %8 = arith.maximumf %6, %7 : vector<8x128xf32>
    %9 = arith.truncf %8 : vector<8x128xf32> to vector<8x128xbf16>
    %c0_6 = arith.constant 0 : index
    %c0_7 = arith.constant 0 : index
    %10 = vector.load %arg4[%c0_6, %c0_7] : memref<128x256xbf16, #tpu.memory_space<vmem>>, vector<128x256xbf16>
    %cst_8 = arith.constant dense<0.000000e+00> : vector<8x256xf32>
    %11 = tpu.matmul %9, %10, %cst_8 {dimension_numbers = #tpu.dot_dimension_numbers<[1], [0], [0], [1], [0, 0, 1, 1], [], []>} : vector<8x128xbf16>, vector<128x256xbf16>, vector<8x256xf32> -> vector<8x256xf32>
    %c0_9 = arith.constant 0 : index
    %c0_10 = arith.constant 0 : index
    %12 = vector.load %arg5[%c0_9, %c0_10] : memref<1x256xf32, #tpu.memory_space<vmem>>, vector<1x256xf32>
    %13 = vector.broadcast %12 : vector<1x256xf32> to vector<8x256xf32>
    %14 = arith.addf %11, %13 : vector<8x256xf32>
    %cst_11 = arith.constant 0.000000e+00 : f32
    %15 = vector.broadcast %cst_11 : f32 to vector<8x256xf32>
    %16 = arith.maximumf %14, %15 : vector<8x256xf32>
    %17 = arith.truncf %16 : vector<8x256xf32> to vector<8x256xbf16>
    %c0_12 = arith.constant 0 : index
    %c0_13 = arith.constant 0 : index
    %18 = vector.load %arg6[%c0_12, %c0_13] : memref<256x512xbf16, #tpu.memory_space<vmem>>, vector<256x512xbf16>
    %cst_14 = arith.constant dense<0.000000e+00> : vector<8x512xf32>
    %19 = tpu.matmul %17, %18, %cst_14 {dimension_numbers = #tpu.dot_dimension_numbers<[1], [0], [0], [1], [0, 0, 1, 1], [], []>} : vector<8x256xbf16>, vector<256x512xbf16>, vector<8x512xf32> -> vector<8x512xf32>
    %c0_15 = arith.constant 0 : index
    %c0_16 = arith.constant 0 : index
    %20 = vector.load %arg7[%c0_15, %c0_16] : memref<1x512xf32, #tpu.memory_space<vmem>>, vector<1x512xf32>
    %21 = vector.broadcast %20 : vector<1x512xf32> to vector<8x512xf32>
    %22 = arith.addf %19, %21 : vector<8x512xf32>
    %cst_17 = arith.constant 0.000000e+00 : f32
    %23 = vector.broadcast %cst_17 : f32 to vector<8x512xf32>
    %24 = arith.maximumf %22, %23 : vector<8x512xf32>
    %25 = arith.truncf %24 : vector<8x512xf32> to vector<8x512xbf16>
    %c0_18 = arith.constant 0 : index
    %c0_19 = arith.constant 0 : index
    %26 = vector.load %arg8[%c0_18, %c0_19] : memref<512x256xbf16, #tpu.memory_space<vmem>>, vector<512x256xbf16>
    %cst_20 = arith.constant dense<0.000000e+00> : vector<8x256xf32>
    %27 = tpu.matmul %25, %26, %cst_20 {dimension_numbers = #tpu.dot_dimension_numbers<[1], [0], [0], [1], [0, 0, 1, 1], [], []>} : vector<8x512xbf16>, vector<512x256xbf16>, vector<8x256xf32> -> vector<8x256xf32>
    %c0_21 = arith.constant 0 : index
    %c0_22 = arith.constant 0 : index
    %28 = vector.load %arg9[%c0_21, %c0_22] : memref<1x256xf32, #tpu.memory_space<vmem>>, vector<1x256xf32>
    %29 = vector.broadcast %28 : vector<1x256xf32> to vector<8x256xf32>
    %30 = arith.addf %27, %29 : vector<8x256xf32>
    %cst_23 = arith.constant 0.000000e+00 : f32
    %31 = vector.broadcast %cst_23 : f32 to vector<8x256xf32>
    %32 = arith.maximumf %30, %31 : vector<8x256xf32>
    %c0_24 = arith.constant 0 : index
    %c0_25 = arith.constant 0 : index
    %33 = vector.load %arg10[%c0_24, %c0_25] : memref<1x256xf32, #tpu.memory_space<vmem>>, vector<1x256xf32>
    %34 = vector.broadcast %33 : vector<1x256xf32> to vector<8x256xf32>
    %35 = arith.mulf %32, %34 : vector<8x256xf32>
    %cst_26 = arith.constant dense<0.000000e+00> : vector<8xf32>
    %36 = vector.multi_reduction <add>, %35, %cst_26 [1] : vector<8x256xf32> to vector<8xf32>
    %37 = vector.shape_cast %36 : vector<8xf32> to vector<1x1x8xf32>
    %c0_27 = arith.constant 0 : index
    %c0_28 = arith.constant 0 : index
    %38 = vector.load %arg11[%c0_27, %c0_28] : memref<1x1xf32, #tpu.memory_space<vmem>>, vector<1x1xf32>
    %39 = vector.shape_cast %38 : vector<1x1xf32> to vector<1x1x1xf32>
    %40 = vector.broadcast %39 : vector<1x1x1xf32> to vector<1x1x8xf32>
    %41 = arith.addf %37, %40 : vector<1x1x8xf32>
    %c0_29 = arith.constant 0 : index
    %c0_30 = arith.constant 0 : index
    %c0_31 = arith.constant 0 : index
    %42 = vector.load %arg12[%c0_29, %c0_30, %c0_31] : memref<1x1x8xf32, #tpu.memory_space<vmem>>, vector<1x1x8xf32>
    tpu.vector_store %arg12[%c0_29, %c0_30, %c0_31], %41 {strides = array<i32>} : memref<1x1x8xf32, #tpu.memory_space<vmem>>, vector<1x1x8xf32>,
    return
  }
  func.func @transform_0(%arg0: i32) -> (i32, i32) {
    %c0_i32 = arith.constant 0 : i32
    %c0_i32_0 = arith.constant 0 : i32
    return %arg0, %c0_i32 : i32, i32
  }
  func.func @transform_1(%arg0: i32) -> (i32, i32) {
    %c0_i32 = arith.constant 0 : i32
    %c0_i32_0 = arith.constant 0 : i32
    %c0_i32_1 = arith.constant 0 : i32
    return %c0_i32, %c0_i32_0 : i32, i32
  }
  func.func @transform_2(%arg0: i32) -> (i32, i32) {
    %c0_i32 = arith.constant 0 : i32
    %c0_i32_0 = arith.constant 0 : i32
    %c0_i32_1 = arith.constant 0 : i32
    return %c0_i32, %c0_i32_0 : i32, i32
  }
  func.func @transform_3(%arg0: i32) -> (i32, i32) {
    %c0_i32 = arith.constant 0 : i32
    %c0_i32_0 = arith.constant 0 : i32
    %c0_i32_1 = arith.constant 0 : i32
    return %c0_i32, %c0_i32_0 : i32, i32
  }
  func.func @transform_4(%arg0: i32) -> (i32, i32) {
    %c0_i32 = arith.constant 0 : i32
    %c0_i32_0 = arith.constant 0 : i32
    %c0_i32_1 = arith.constant 0 : i32
    return %c0_i32, %c0_i32_0 : i32, i32
  }
  func.func @transform_5(%arg0: i32) -> (i32, i32) {
    %c0_i32 = arith.constant 0 : i32
    %c0_i32_0 = arith.constant 0 : i32
    %c0_i32_1 = arith.constant 0 : i32
    return %c0_i32, %c0_i32_0 : i32, i32
  }
  func.func @transform_6(%arg0: i32) -> (i32, i32) {
    %c0_i32 = arith.constant 0 : i32
    %c0_i32_0 = arith.constant 0 : i32
    %c0_i32_1 = arith.constant 0 : i32
    return %c0_i32, %c0_i32_0 : i32, i32
  }
  func.func @transform_7(%arg0: i32) -> (i32, i32) {
    %c0_i32 = arith.constant 0 : i32
    %c0_i32_0 = arith.constant 0 : i32
    %c0_i32_1 = arith.constant 0 : i32
    return %c0_i32, %c0_i32_0 : i32, i32
  }
  func.func @transform_8(%arg0: i32) -> (i32, i32) {
    %c0_i32 = arith.constant 0 : i32
    %c0_i32_0 = arith.constant 0 : i32
    %c0_i32_1 = arith.constant 0 : i32
    return %c0_i32, %c0_i32_0 : i32, i32
  }
  func.func @transform_9(%arg0: i32) -> (i32, i32) {
    %c0_i32 = arith.constant 0 : i32
    %c0_i32_0 = arith.constant 0 : i32
    %c0_i32_1 = arith.constant 0 : i32
    return %c0_i32, %c0_i32_0 : i32, i32
  }
  func.func @transform_10(%arg0: i32) -> (i32, i32) {
    %c0_i32 = arith.constant 0 : i32
    %c0_i32_0 = arith.constant 0 : i32
    %c0_i32_1 = arith.constant 0 : i32
    return %c0_i32, %c0_i32_0 : i32, i32
  }
  func.func @transform_11(%arg0: i32) -> (i32, i32, i32) {
    %c0_i32 = arith.constant 0 : i32
    %c0_i32_0 = arith.constant 0 : i32
    %c0_i32_1 = arith.constant 0 : i32
    return %arg0, %c0_i32, %c0_i32_0 : i32, i32, i32
  }
}

</mosaic_0001>

<llo_original>
// kernel: tpu_custom_call.1
$region0: #{tpu_custom_call.1}
  #allocation0 [shape = 'u32[]', space=smem, size = 0x4, offset = 0x4, fixed_abs, tag = 'smem constant byte address 0x4 - core index']
  #allocation1 [shape = 'u32[144,128]{1,0:T(1,128)}', space=vmem, size = 0x12000, scoped, tag = 'internal scratch']
  #allocation2 [shape = 'f32[1,1]{1,0:T(1,128)S(1)}', space=vmem, size = 0x200, scoped, tag = 'scoped memory for tpu_custom_call.1']
  %s0 = inlined_call_operand.hbm [shape: f32[8,8], index: 0, kind: input, shape index: {}]
  %s1 = inlined_call_operand.vmem [shape: bf16[8,128], index: 1, kind: input, shape index: {}]
  %s2 = inlined_call_operand.vmem [shape: f32[1,128], index: 2, kind: input, shape index: {}]
  %s3 = inlined_call_operand.hbm [shape: bf16[128,256], index: 3, kind: input, shape index: {}]
  %s4 = inlined_call_operand.vmem [shape: f32[1,256], index: 4, kind: input, shape index: {}]
  %s5 = inlined_call_operand.hbm [shape: bf16[256,512], index: 5, kind: input, shape index: {}]
  %s6 = inlined_call_operand.vmem [shape: f32[1,512], index: 6, kind: input, shape index: {}]
  %s7 = inlined_call_operand.hbm [shape: bf16[512,256], index: 7, kind: input, shape index: {}]
  %s8 = inlined_call_operand.vmem [shape: f32[1,256], index: 8, kind: input, shape index: {}]
  %s9 = inlined_call_operand.vmem [shape: f32[1,256], index: 9, kind: input, shape index: {}]
  %s10 = inlined_call_operand.<no memory space> [shape: f32[1,1], index: 10, kind: input, shape index: {}]
  %s11 = inlined_call_operand.hbm [shape: f32[1,1,8], index: 11, kind: output, shape index: {}]
  %s12 = sld [smem:[#allocation0]]
  $region70: #{tpu_custom_call.1} parent=0
    _
  %s14 = ssub.s32 1, %s12
  %s15 = scalar_select 0, %s14, %s12
  %v16 = vstv %s10
  %17 = vst [vmem:[#allocation2] sm:$0x1] %v16
  $region1: #{tpu_custom_call.1} parent=0
    #allocation3 [shape = 'u8[4096]{0}', space=vmem, size = 0x1000, scoped, tag = 'input window, operand 0, single buffered']
    #allocation4 [shape = 's32[1]{0}', space=sflag, size = 0x4, scoped, tag = 'scoped memory for tpu_custom_call.1']
    #allocation5 [shape = 's32[1]{0}', space=sflag, size = 0x4, scoped, tag = 'scoped memory for tpu_custom_call.1']
    #allocation6 [shape = 'u8[65536]{0}', space=vmem, size = 0x10000, scoped, tag = 'input window, operand 3, single buffered']
    #allocation7 [shape = 's32[1]{0}', space=sflag, size = 0x4, scoped, tag = 'scoped memory for tpu_custom_call.1']
    #allocation8 [shape = 'u8[262144]{0}', space=vmem, size = 0x40000, scoped, tag = 'input window, operand 5, single buffered']
    #allocation9 [shape = 'u8[262144]{0}', space=vmem, size = 0x40000, scoped, tag = 'input window, operand 7, single buffered']
    #allocation10 [shape = 's32[1]{0}', space=sflag, size = 0x4, scoped, tag = 'scoped memory for tpu_custom_call.1']
    #allocation11 [shape = 'u8[512]{0}', space=vmem, size = 0x400, scoped, tag = 'output window, operand 0, single buffered']
    %18 = vsyncpa [#allocation4], 0
    %19 = vsyncpa [#allocation7], 0
    %20 = vsyncpa [#allocation10], 0
    %21 = vsyncpa [#allocation5], 0
    // Predicated region
    $region2: #{tpu_custom_call.1} parent=1 // pred_check
      _
    $region3: #{tpu_custom_call.1} parent=1 // pred_check_branch
      %23 = sbr.rel (0) target = $region5
    $region4: #{tpu_custom_call.1} parent=1 // pred_region
      %s25 = ssub.s32 128, 128
      %26 = vsyncadd [#allocation4], %s25
      %s28 = sshll.u32 [#allocation3], 4
      %s29 = int_to_ptr.vmem [resolvable:$true] %s28
      %31 = dma.hbm_to_vmem [thread:$0]  %s0, 128, %s29, [#allocation4]
    $region5: #{tpu_custom_call.1} parent=1 // pred_fallthru
      _
    // Predicated region
    $region6: #{tpu_custom_call.1} parent=1 // pred_check
      _
    $region7: #{tpu_custom_call.1} parent=1 // pred_check_branch
      %33 = sbr.rel (0) target = $region9
    $region8: #{tpu_custom_call.1} parent=1 // pred_region
      _
    $region9: #{tpu_custom_call.1} parent=1 // pred_fallthru
      _
    // Predicated region
    $region10: #{tpu_custom_call.1} parent=1 // pred_check
      _
    $region11: #{tpu_custom_call.1} parent=1 // pred_check_branch
      %35 = sbr.rel (0) target = $region13
    $region12: #{tpu_custom_call.1} parent=1 // pred_region
      _
    $region13: #{tpu_custom_call.1} parent=1 // pred_fallthru
      _
    // Predicated region
    $region14: #{tpu_custom_call.1} parent=1 // pred_check
      _
    $region15: #{tpu_custom_call.1} parent=1 // pred_check_branch
      %37 = sbr.rel (0) target = $region17
    $region16: #{tpu_custom_call.1} parent=1 // pred_region
      %s39 = ssub.s32 2048, 2048
      %40 = vsyncadd [#allocation7], %s39
      %s41 = sshll.u32 [#allocation6], 4
      %s42 = int_to_ptr.vmem [resolvable:$true] %s41
      %47 = dma.hbm_to_vmem [thread:$0]  %s3, 2048, %s42, [#allocation7], 128, 128, 8
    $region17: #{tpu_custom_call.1} parent=1 // pred_fallthru
      _
    // Predicated region
    $region18: #{tpu_custom_call.1} parent=1 // pred_check
      _
    $region19: #{tpu_custom_call.1} parent=1 // pred_check_branch
      %49 = sbr.rel (0) target = $region21
    $region20: #{tpu_custom_call.1} parent=1 // pred_region
      _
    $region21: #{tpu_custom_call.1} parent=1 // pred_fallthru
      _
    // Predicated region
    $region22: #{tpu_custom_call.1} parent=1 // pred_check
      _
    $region23: #{tpu_custom_call.1} parent=1 // pred_check_branch
      %51 = sbr.rel (0) target = $region25
    $region24: #{tpu_custom_call.1} parent=1 // pred_region
      %s53 = ssub.s32 8192, 8192
      %54 = vsyncadd [#allocation7], %s53
      %s55 = sshll.u32 [#allocation8], 4
      %s56 = int_to_ptr.vmem [resolvable:$true] %s55
      %61 = dma.hbm_to_vmem [thread:$0]  %s5, 8192, %s56, [#allocation7], 256, 256, 16
    $region25: #{tpu_custom_call.1} parent=1 // pred_fallthru
      _
    // Predicated region
    $region26: #{tpu_custom_call.1} parent=1 // pred_check
      _
    $region27: #{tpu_custom_call.1} parent=1 // pred_check_branch
      %63 = sbr.rel (0) target = $region29
    $region28: #{tpu_custom_call.1} parent=1 // pred_region
      _
    $region29: #{tpu_custom_call.1} parent=1 // pred_fallthru
      _
    // Predicated region
    $region30: #{tpu_custom_call.1} parent=1 // pred_check
      _
    $region31: #{tpu_custom_call.1} parent=1 // pred_check_branch
      %65 = sbr.rel (0) target = $region33
    $region32: #{tpu_custom_call.1} parent=1 // pred_region
      %s67 = ssub.s32 8192, 8192
      %68 = vsyncadd [#allocation10], %s67
      %s69 = sshll.u32 [#allocation9], 4
      %s70 = int_to_ptr.vmem [resolvable:$true] %s69
      %75 = dma.hbm_to_vmem [thread:$0]  %s7, 8192, %s70, [#allocation10], 128, 128, 8
    $region33: #{tpu_custom_call.1} parent=1 // pred_fallthru
      _
    // Predicated region
    $region34: #{tpu_custom_call.1} parent=1 // pred_check
      _
    $region35: #{tpu_custom_call.1} parent=1 // pred_check_branch
      %77 = sbr.rel (0) target = $region37
    $region36: #{tpu_custom_call.1} parent=1 // pred_region
      _
    $region37: #{tpu_custom_call.1} parent=1 // pred_fallthru
      _
    // Predicated region
    $region38: #{tpu_custom_call.1} parent=1 // pred_check
      _
    $region39: #{tpu_custom_call.1} parent=1 // pred_check_branch
      %79 = sbr.rel (0) target = $region41
    $region40: #{tpu_custom_call.1} parent=1 // pred_region
      _
    $region41: #{tpu_custom_call.1} parent=1 // pred_fallthru
      _
    // Predicated region
    $region42: #{tpu_custom_call.1} parent=1 // pred_check
      _
    $region43: #{tpu_custom_call.1} parent=1 // pred_check_branch
      %81 = sbr.rel (0) target = $region45
    $region44: #{tpu_custom_call.1} parent=1 // pred_region
      _
    $region45: #{tpu_custom_call.1} parent=1 // pred_fallthru
      _
    // Predicated region
    $region46: #{tpu_custom_call.1} parent=1 // pred_check
      _
    $region47: #{tpu_custom_call.1} parent=1 // pred_check_branch
      %83 = sbr.rel (0) target = $region49
    $region48: #{tpu_custom_call.1} parent=1 // pred_region
      %84 = dma.done [#allocation4], 128
    $region49: #{tpu_custom_call.1} parent=1 // pred_fallthru
      _
    // Predicated region
    $region50: #{tpu_custom_call.1} parent=1 // pred_check
      _
    $region51: #{tpu_custom_call.1} parent=1 // pred_check_branch
      %86 = sbr.rel (0) target = $region53
    $region52: #{tpu_custom_call.1} parent=1 // pred_region
      %87 = dma.done [#allocation7], 2048
    $region53: #{tpu_custom_call.1} parent=1 // pred_fallthru
      _
    // Predicated region
    $region54: #{tpu_custom_call.1} parent=1 // pred_check
      _
    $region55: #{tpu_custom_call.1} parent=1 // pred_check_branch
      %89 = sbr.rel (0) target = $region57
    $region56: #{tpu_custom_call.1} parent=1 // pred_region
      %90 = dma.done [#allocation7], 8192
    $region57: #{tpu_custom_call.1} parent=1 // pred_fallthru
      _
    // Predicated region
    $region58: #{tpu_custom_call.1} parent=1 // pred_check
      _
    $region59: #{tpu_custom_call.1} parent=1 // pred_check_branch
      %92 = sbr.rel (0) target = $region61
    $region60: #{tpu_custom_call.1} parent=1 // pred_region
      %93 = dma.done [#allocation10], 8192
    $region61: #{tpu_custom_call.1} parent=1 // pred_fallthru
      _
    %v95 = vld [vmem:[#allocation3] sm:$0xff]
    %v96 = vpack.c.bf16 %v95, %v95
    %v97 = vld [vmem:[%s1] sm:$0xf]
    %v98 = vld [vmem:[%s2] sm:$0x1]
    %v100 = vlaneseq
    %v101 = vshrl.u32 %v100, 7
    %v102 = vsub.s32 0, %v101
    %v103 = vrot.slane %v98, %v102
    %vm105 = vcmask 64512
    %v107 = vsel %vm105, %v96, 0
    %vm109 = vcmask 1043456
    %v111 = vsel %vm109, %v97, 0
    %113 = vmatprep.subr.bf16.mxu0 0
    %114 = vmatpush1.bf16.msra.mxu0 %v111
    %115 = vmatprep.subr.bf16.mxu0 0
    %116 = vmatpush1.bf16.msra.mxu0 0
    %117 = vmatprep.subr.bf16.mxu0 0
    %118 = vmatpush1.bf16.msra.mxu0 0
    %119 = vmatprep.subr.bf16.mxu0 0
    %120 = vmatpush1.bf16.msra.mxu0 0
    %121 = vmatprep.subr.bf16.mxu0 0
    %122 = vmatpush1.bf16.msra.mxu0 0
    %123 = vmatprep.subr.bf16.mxu0 0
    %124 = vmatpush1.bf16.msra.mxu0 0
    %125 = vmatprep.subr.bf16.mxu0 0
    %126 = vmatpush1.bf16.msra.mxu0 0
    %127 = vmatprep.subr.bf16.mxu0 0
    %128 = vmatpush1.bf16.msra.mxu0 0
    %129 = vmatprep.subr.bf16.mxu0 0
    %130 = vmatpush1.bf16.msra.mxu0 0
    %131 = vmatprep.subr.bf16.mxu0 0
    %132 = vmatpush1.bf16.msra.mxu0 0
    %133 = vmatprep.subr.bf16.mxu0 0
    %134 = vmatpush1.bf16.msra.mxu0 0
    %135 = vmatprep.subr.bf16.mxu0 0
    %136 = vmatpush1.bf16.msra.mxu0 0
    %137 = vmatprep.subr.bf16.mxu0 0
    %138 = vmatpush1.bf16.msra.mxu0 0
    %139 = vmatprep.subr.bf16.mxu0 0
    %140 = vmatpush1.bf16.msra.mxu0 0
    %141 = vmatprep.subr.bf16.mxu0 0
    %142 = vmatpush1.bf16.msra.mxu0 0
    %143 = vmatprep.subr.bf16.mxu0 0
    %144 = vmatpush1.bf16.msra.mxu0 0
    %145 = vmatprep.mubr.bf16.mxu0 0
    %146 = vmatmul.mubr.bf16.gmra.mrb[0].mxu0 %v107
    %v147 = vpop.f32.mrb[0].mxu0
    %v148 = vadd.f32 %v103, %v147
    %v149 = vpop.f32.mrb[0].mxu0
    %v150 = vpop.f32.mrb[0].mxu0
    %v151 = vpop.f32.mrb[0].mxu0
    %152 = vdwg.mxu0
    %v153 = vmax.f32 %v148, 0.0
    %v154 = vpack.c.bf16 %v153, %v153
    %v155 = vld [vmem:[#allocation6] sm:$0xff]
    %v156 = vld [vmem:[#allocation6 + $0x8] sm:$0xff]
    %v157 = vld [vmem:[#allocation6 + $0x10] sm:$0xff]
    %v158 = vld [vmem:[#allocation6 + $0x18] sm:$0xff]
    %v159 = vld [vmem:[#allocation6 + $0x20] sm:$0xff]
    %v160 = vld [vmem:[#allocation6 + $0x28] sm:$0xff]
    %v161 = vld [vmem:[#allocation6 + $0x30] sm:$0xff]
    %v162 = vld [vmem:[#allocation6 + $0x38] sm:$0xff]
    %v163 = vld [vmem:[#allocation6 + $0x40] sm:$0xff]
    %v164 = vld [vmem:[#allocation6 + $0x48] sm:$0xff]
    %v165 = vld [vmem:[#allocation6 + $0x50] sm:$0xff]
    %v166 = vld [vmem:[#allocation6 + $0x58] sm:$0xff]
    %v167 = vld [vmem:[#allocation6 + $0x60] sm:$0xff]
    %v168 = vld [vmem:[#allocation6 + $0x68] sm:$0xff]
    %v169 = vld [vmem:[#allocation6 + $0x70] sm:$0xff]
    %v170 = vld [vmem:[#allocation6 + $0x78] sm:$0xff]
    %v171 = vld [vmem:[%s4] sm:$0x3]
    %v173 = vlaneseq
    %v174 = vshrl.u32 %v173, 7
    %v175 = vsub.s32 0, %v174
    %v176 = vrot.slane %v171, %v175
    %v177 = vlaneseq
    %v178 = vshrl.u32 %v177, 7
    %v179 = vsub.s32 1, %v178
    %v180 = vrot.slane %v171, %v179
    %v199 = vunpack.c.l.b16 %v155
    %v200 = vunpack.c.h.b16 %v155
    %v201 = vunpack.c.l.b16 %v156
    %v202 = vunpack.c.h.b16 %v156
    %v203 = vunpack.c.l.b16 %v157
    %v204 = vunpack.c.h.b16 %v157
    %v205 = vunpack.c.l.b16 %v158
    %v206 = vunpack.c.h.b16 %v158
    %v207 = vunpack.c.l.b16 %v159
    %v208 = vunpack.c.h.b16 %v159
    %v209 = vunpack.c.l.b16 %v160
    %v210 = vunpack.c.h.b16 %v160
    %v211 = vunpack.c.l.b16 %v161
    %v212 = vunpack.c.h.b16 %v161
    %v213 = vunpack.c.l.b16 %v162
    %v214 = vunpack.c.h.b16 %v162
    %v215 = vunpack.c.l.b16 %v163
    %v216 = vunpack.c.h.b16 %v163
    %v217 = vunpack.c.l.b16 %v164
    %v218 = vunpack.c.h.b16 %v164
    %v219 = vunpack.c.l.b16 %v165
    %v220 = vunpack.c.h.b16 %v165
    %v221 = vunpack.c.l.b16 %v166
    %v222 = vunpack.c.h.b16 %v166
    %v223 = vunpack.c.l.b16 %v167
    %v224 = vunpack.c.h.b16 %v167
    %v225 = vunpack.c.l.b16 %v168
    %v226 = vunpack.c.h.b16 %v168
    %v227 = vunpack.c.l.b16 %v169
    %v228 = vunpack.c.h.b16 %v169
    %v229 = vunpack.c.l.b16 %v170
    %v230 = vunpack.c.h.b16 %v170
    %v231 = vpack.c.b16 %v201, %v199
    %v232 = vpack.c.b16 %v202, %v200
    %v233 = vpack.c.b16 %v205, %v203
    %v234 = vpack.c.b16 %v206, %v204
    %v235 = vpack.c.b16 %v209, %v207
    %v236 = vpack.c.b16 %v210, %v208
    %v237 = vpack.c.b16 %v213, %v211
    %v238 = vpack.c.b16 %v214, %v212
    %v239 = vpack.c.b16 %v217, %v215
    %v240 = vpack.c.b16 %v218, %v216
    %v241 = vpack.c.b16 %v221, %v219
    %v242 = vpack.c.b16 %v222, %v220
    %v243 = vpack.c.b16 %v225, %v223
    %v244 = vpack.c.b16 %v226, %v224
    %v245 = vpack.c.b16 %v229, %v227
    %v246 = vpack.c.b16 %v230, %v228
    %263 = vmatprep.subr.bf16.mxu0 %v232
    %264 = vmatpush1.bf16.msra.mxu0 %v231
    %265 = vmatprep.subr.bf16.mxu0 %v234
    %266 = vmatpush1.bf16.msra.mxu0 %v233
    %267 = vmatprep.subr.bf16.mxu0 %v236
    %268 = vmatpush1.bf16.msra.mxu0 %v235
    %269 = vmatprep.subr.bf16.mxu0 %v238
    %270 = vmatpush1.bf16.msra.mxu0 %v237
    %271 = vmatprep.subr.bf16.mxu0 %v240
    %272 = vmatpush1.bf16.msra.mxu0 %v239
    %273 = vmatprep.subr.bf16.mxu0 %v242
    %274 = vmatpush1.bf16.msra.mxu0 %v241
    %275 = vmatprep.subr.bf16.mxu0 %v244
    %276 = vmatpush1.bf16.msra.mxu0 %v243
    %277 = vmatprep.subr.bf16.mxu0 %v246
    %278 = vmatpush1.bf16.msra.mxu0 %v245
    %279 = vmatprep.subr.bf16.mxu0 0
    %280 = vmatpush1.bf16.msra.mxu0 0
    %281 = vmatprep.subr.bf16.mxu0 0
    %282 = vmatpush1.bf16.msra.mxu0 0
    %283 = vmatprep.subr.bf16.mxu0 0
    %284 = vmatpush1.bf16.msra.mxu0 0
    %285 = vmatprep.subr.bf16.mxu0 0
    %286 = vmatpush1.bf16.msra.mxu0 0
    %287 = vmatprep.subr.bf16.mxu0 0
    %288 = vmatpush1.bf16.msra.mxu0 0
    %289 = vmatprep.subr.bf16.mxu0 0
    %290 = vmatpush1.bf16.msra.mxu0 0
    %291 = vmatprep.subr.bf16.mxu0 0
    %292 = vmatpush1.bf16.msra.mxu0 0
    %293 = vmatprep.subr.bf16.mxu0 0
    %294 = vmatpush1.bf16.msra.mxu0 0
    %295 = vmatprep.mubr.bf16.mxu0 0
    %296 = vmatmul.mubr.bf16.gmra.mrb[0].mxu0 %v154
    %v297 = vpop.f32.mrb[0].mxu0
    %v298 = vadd.f32 %v176, %v297
    %v299 = vpop.f32.mrb[0].mxu0
    %v300 = vadd.f32 %v180, %v299
    %v301 = vpop.f32.mrb[0].mxu0
    %v302 = vpop.f32.mrb[0].mxu0
    %303 = vdwg.mxu0
    %v304 = vmax.f32 %v298, 0.0
    %v305 = vmax.f32 %v300, 0.0
    %v306 = vpack.c.bf16 %v304, %v304
    %v307 = vpack.c.bf16 %v305, %v305
    %v308 = vld [vmem:[#allocation8] sm:$0xff]
    %v309 = vld [vmem:[#allocation8 + $0x8] sm:$0xff]
    %v310 = vld [vmem:[#allocation8 + $0x10] sm:$0xff]
    %v311 = vld [vmem:[#allocation8 + $0x18] sm:$0xff]
    %v312 = vld [vmem:[#allocation8 + $0x20] sm:$0xff]
    %v313 = vld [vmem:[#allocation8 + $0x28] sm:$0xff]
    %v314 = vld [vmem:[#allocation8 + $0x30] sm:$0xff]
    %v315 = vld [vmem:[#allocation8 + $0x38] sm:$0xff]
    %v316 = vld [vmem:[#allocation8 + $0x40] sm:$0xff]
    %v317 = vld [vmem:[#allocation8 + $0x48] sm:$0xff]
    %v318 = vld [vmem:[#allocation8 + $0x50] sm:$0xff]
    %v319 = vld [vmem:[#allocation8 + $0x58] sm:$0xff]
    %v320 = vld [vmem:[#allocation8 + $0x60] sm:$0xff]
    %v321 = vld [vmem:[#allocation8 + $0x68] sm:$0xff]
    %v322 = vld [vmem:[#allocation8 + $0x70] sm:$0xff]
    %v323 = vld [vmem:[#allocation8 + $0x78] sm:$0xff]
    %v324 = vld [vmem:[#allocation8 + $0x80] sm:$0xff]
    %v325 = vld [vmem:[#allocation8 + $0x88] sm:$0xff]
    %v326 = vld [vmem:[#allocation8 + $0x90] sm:$0xff]
    %v327 = vld [vmem:[#allocation8 + $0x98] sm:$0xff]
    %v328 = vld [vmem:[#allocation8 + $0xa0] sm:$0xff]
    %v329 = vld [vmem:[#allocation8 + $0xa8] sm:$0xff]
    %v330 = vld [vmem:[#allocation8 + $0xb0] sm:$0xff]
    %v331 = vld [vmem:[#allocation8 + $0xb8] sm:$0xff]
    %v332 = vld [vmem:[#allocation8 + $0xc0] sm:$0xff]
    %v333 = vld [vmem:[#allocation8 + $0xc8] sm:$0xff]
    %v334 = vld [vmem:[#allocation8 + $0xd0] sm:$0xff]
    %v335 = vld [vmem:[#allocation8 + $0xd8] sm:$0xff]
    %v336 = vld [vmem:[#allocation8 + $0xe0] sm:$0xff]
    %v337 = vld [vmem:[#allocation8 + $0xe8] sm:$0xff]
    %v338 = vld [vmem:[#allocation8 + $0xf0] sm:$0xff]
    %v339 = vld [vmem:[#allocation8 + $0xf8] sm:$0xff]
    %v340 = vld [vmem:[#allocation8 + $0x100] sm:$0xff]
    %v341 = vld [vmem:[#allocation8 + $0x108] sm:$0xff]
    %v342 = vld [vmem:[#allocation8 + $0x110] sm:$0xff]
    %v343 = vld [vmem:[#allocation8 + $0x118] sm:$0xff]
    %v344 = vld [vmem:[#allocation8 + $0x120] sm:$0xff]
    %v345 = vld [vmem:[#allocation8 + $0x128] sm:$0xff]
    %v346 = vld [vmem:[#allocation8 + $0x130] sm:$0xff]
    %v347 = vld [vmem:[#allocation8 + $0x138] sm:$0xff]
    %v348 = vld [vmem:[#allocation8 + $0x140] sm:$0xff]
    %v349 = vld [vmem:[#allocation8 + $0x148] sm:$0xff]
    %v350 = vld [vmem:[#allocation8 + $0x150] sm:$0xff]
    %v351 = vld [vmem:[#allocation8 + $0x158] sm:$0xff]
    %v352 = vld [vmem:[#allocation8 + $0x160] sm:$0xff]
    %v353 = vld [vmem:[#allocation8 + $0x168] sm:$0xff]
    %v354 = vld [vmem:[#allocation8 + $0x170] sm:$0xff]
    %v355 = vld [vmem:[#allocation8 + $0x178] sm:$0xff]
    %v356 = vld [vmem:[#allocation8 + $0x180] sm:$0xff]
    %v357 = vld [vmem:[#allocation8 + $0x188] sm:$0xff]
    %v358 = vld [vmem:[#allocation8 + $0x190] sm:$0xff]
    %v359 = vld [vmem:[#allocation8 + $0x198] sm:$0xff]
    %v360 = vld [vmem:[#allocation8 + $0x1a0] sm:$0xff]
    %v361 = vld [vmem:[#allocation8 + $0x1a8] sm:$0xff]
    %v362 = vld [vmem:[#allocation8 + $0x1b0] sm:$0xff]
    %v363 = vld [vmem:[#allocation8 + $0x1b8] sm:$0xff]
    %v364 = vld [vmem:[#allocation8 + $0x1c0] sm:$0xff]
    %v365 = vld [vmem:[#allocation8 + $0x1c8] sm:$0xff]
    %v366 = vld [vmem:[#allocation8 + $0x1d0] sm:$0xff]
    %v367 = vld [vmem:[#allocation8 + $0x1d8] sm:$0xff]
    %v368 = vld [vmem:[#allocation8 + $0x1e0] sm:$0xff]
    %v369 = vld [vmem:[#allocation8 + $0x1e8] sm:$0xff]
    %v370 = vld [vmem:[#allocation8 + $0x1f0] sm:$0xff]
    %v371 = vld [vmem:[#allocation8 + $0x1f8] sm:$0xff]
    %v372 = vld [vmem:[%s6] sm:$0xf]
    %v374 = vlaneseq
    %v375 = vshrl.u32 %v374, 7
    %v376 = vsub.s32 0, %v375
    %v377 = vrot.slane %v372, %v376
    %v378 = vlaneseq
    %v379 = vshrl.u32 %v378, 7
    %v380 = vsub.s32 1, %v379
    %v381 = vrot.slane %v372, %v380
    %v382 = vlaneseq
    %v383 = vshrl.u32 %v382, 7
    %v384 = vsub.s32 2, %v383
    %v385 = vrot.slane %v372, %v384
    %v386 = vlaneseq
    %v387 = vshrl.u32 %v386, 7
    %v388 = vsub.s32 3, %v387
    %v389 = vrot.slane %v372, %v388
    %v458 = vunpack.c.l.b16 %v308
    %v459 = vunpack.c.h.b16 %v308
    %v460 = vunpack.c.l.b16 %v309
    %v461 = vunpack.c.h.b16 %v309
    %v462 = vunpack.c.l.b16 %v310
    %v463 = vunpack.c.h.b16 %v310
    %v464 = vunpack.c.l.b16 %v311
    %v465 = vunpack.c.h.b16 %v311
    %v466 = vunpack.c.l.b16 %v312
    %v467 = vunpack.c.h.b16 %v312
    %v468 = vunpack.c.l.b16 %v313
    %v469 = vunpack.c.h.b16 %v313
    %v470 = vunpack.c.l.b16 %v314
    %v471 = vunpack.c.h.b16 %v314
    %v472 = vunpack.c.l.b16 %v315
    %v473 = vunpack.c.h.b16 %v315
    %v474 = vunpack.c.l.b16 %v316
    %v475 = vunpack.c.h.b16 %v316
    %v476 = vunpack.c.l.b16 %v317
    %v477 = vunpack.c.h.b16 %v317
    %v478 = vunpack.c.l.b16 %v318
    %v479 = vunpack.c.h.b16 %v318
    %v480 = vunpack.c.l.b16 %v319
    %v481 = vunpack.c.h.b16 %v319
    %v482 = vunpack.c.l.b16 %v320
    %v483 = vunpack.c.h.b16 %v320
    %v484 = vunpack.c.l.b16 %v321
    %v485 = vunpack.c.h.b16 %v321
    %v486 = vunpack.c.l.b16 %v322
    %v487 = vunpack.c.h.b16 %v322
    %v488 = vunpack.c.l.b16 %v323
    %v489 = vunpack.c.h.b16 %v323
    %v490 = vunpack.c.l.b16 %v324
    %v491 = vunpack.c.h.b16 %v324
    %v492 = vunpack.c.l.b16 %v325
    %v493 = vunpack.c.h.b16 %v325
    %v494 = vunpack.c.l.b16 %v326
    %v495 = vunpack.c.h.b16 %v326
    %v496 = vunpack.c.l.b16 %v327
    %v497 = vunpack.c.h.b16 %v327
    %v498 = vunpack.c.l.b16 %v328
    %v499 = vunpack.c.h.b16 %v328
    %v500 = vunpack.c.l.b16 %v329
    %v501 = vunpack.c.h.b16 %v329
    %v502 = vunpack.c.l.b16 %v330
    %v503 = vunpack.c.h.b16 %v330
    %v504 = vunpack.c.l.b16 %v331
    %v505 = vunpack.c.h.b16 %v331
    %v506 = vunpack.c.l.b16 %v332
    %v507 = vunpack.c.h.b16 %v332
    %v508 = vunpack.c.l.b16 %v333
    %v509 = vunpack.c.h.b16 %v333
    %v510 = vunpack.c.l.b16 %v334
    %v511 = vunpack.c.h.b16 %v334
    %v512 = vunpack.c.l.b16 %v335
    %v513 = vunpack.c.h.b16 %v335
    %v514 = vunpack.c.l.b16 %v336
    %v515 = vunpack.c.h.b16 %v336
    %v516 = vunpack.c.l.b16 %v337
    %v517 = vunpack.c.h.b16 %v337
    %v518 = vunpack.c.l.b16 %v338
    %v519 = vunpack.c.h.b16 %v338
    %v520 = vunpack.c.l.b16 %v339
    %v521 = vunpack.c.h.b16 %v339
    %v522 = vunpack.c.l.b16 %v340
    %v523 = vunpack.c.h.b16 %v340
    %v524 = vunpack.c.l.b16 %v341
    %v525 = vunpack.c.h.b16 %v341
    %v526 = vunpack.c.l.b16 %v342
    %v527 = vunpack.c.h.b16 %v342
    %v528 = vunpack.c.l.b16 %v343
    %v529 = vunpack.c.h.b16 %v343
    %v530 = vunpack.c.l.b16 %v344
    %v531 = vunpack.c.h.b16 %v344
    %v532 = vunpack.c.l.b16 %v345
    %v533 = vunpack.c.h.b16 %v345
    %v534 = vunpack.c.l.b16 %v346
    %v535 = vunpack.c.h.b16 %v346
    %v536 = vunpack.c.l.b16 %v347
    %v537 = vunpack.c.h.b16 %v347
    %v538 = vunpack.c.l.b16 %v348
    %v539 = vunpack.c.h.b16 %v348
    %v540 = vunpack.c.l.b16 %v349
    %v541 = vunpack.c.h.b16 %v349
    %v542 = vunpack.c.l.b16 %v350
    %v543 = vunpack.c.h.b16 %v350
    %v544 = vunpack.c.l.b16 %v351
    %v545 = vunpack.c.h.b16 %v351
    %v546 = vunpack.c.l.b16 %v352
    %v547 = vunpack.c.h.b16 %v352
    %v548 = vunpack.c.l.b16 %v353
    %v549 = vunpack.c.h.b16 %v353
    %v550 = vunpack.c.l.b16 %v354
    %v551 = vunpack.c.h.b16 %v354
    %v552 = vunpack.c.l.b16 %v355
    %v553 = vunpack.c.h.b16 %v355
    %v554 = vunpack.c.l.b16 %v356
    %v555 = vunpack.c.h.b16 %v356
    %v556 = vunpack.c.l.b16 %v357
    %v557 = vunpack.c.h.b16 %v357
    %v558 = vunpack.c.l.b16 %v358
    %v559 = vunpack.c.h.b16 %v358
    %v560 = vunpack.c.l.b16 %v359
    %v561 = vunpack.c.h.b16 %v359
    %v562 = vunpack.c.l.b16 %v360
    %v563 = vunpack.c.h.b16 %v360
    %v564 = vunpack.c.l.b16 %v361
    %v565 = vunpack.c.h.b16 %v361
    %v566 = vunpack.c.l.b16 %v362
    %v567 = vunpack.c.h.b16 %v362
    %v568 = vunpack.c.l.b16 %v363
    %v569 = vunpack.c.h.b16 %v363
    %v570 = vunpack.c.l.b16 %v364
    %v571 = vunpack.c.h.b16 %v364
    %v572 = vunpack.c.l.b16 %v365
    %v573 = vunpack.c.h.b16 %v365
    %v574 = vunpack.c.l.b16 %v366
    %v575 = vunpack.c.h.b16 %v366
    %v576 = vunpack.c.l.b16 %v367
    %v577 = vunpack.c.h.b16 %v367
    %v578 = vunpack.c.l.b16 %v368
    %v579 = vunpack.c.h.b16 %v368
    %v580 = vunpack.c.l.b16 %v369
    %v581 = vunpack.c.h.b16 %v369
    %v582 = vunpack.c.l.b16 %v370
    %v583 = vunpack.c.h.b16 %v370
    %v584 = vunpack.c.l.b16 %v371
    %v585 = vunpack.c.h.b16 %v371
    %v586 = vpack.c.b16 %v462, %v458
    %v587 = vpack.c.b16 %v463, %v459
    %v588 = vpack.c.b16 %v464, %v460
    %v589 = vpack.c.b16 %v465, %v461
    %v590 = vpack.c.b16 %v470, %v466
    %v591 = vpack.c.b16 %v471, %v467
    %v592 = vpack.c.b16 %v472, %v468
    %v593 = vpack.c.b16 %v473, %v469
    %v594 = vpack.c.b16 %v478, %v474
    %v595 = vpack.c.b16 %v479, %v475
    %v596 = vpack.c.b16 %v480, %v476
    %v597 = vpack.c.b16 %v481, %v477
    %v598 = vpack.c.b16 %v486, %v482
    %v599 = vpack.c.b16 %v487, %v483
    %v600 = vpack.c.b16 %v488, %v484
    %v601 = vpack.c.b16 %v489, %v485
    %v602 = vpack.c.b16 %v494, %v490
    %v603 = vpack.c.b16 %v495, %v491
    %v604 = vpack.c.b16 %v496, %v492
    %v605 = vpack.c.b16 %v497, %v493
    %v606 = vpack.c.b16 %v502, %v498
    %v607 = vpack.c.b16 %v503, %v499
    %v608 = vpack.c.b16 %v504, %v500
    %v609 = vpack.c.b16 %v505, %v501
    %v610 = vpack.c.b16 %v510, %v506
    %v611 = vpack.c.b16 %v511, %v507
    %v612 = vpack.c.b16 %v512, %v508
    %v613 = vpack.c.b16 %v513, %v509
    %v614 = vpack.c.b16 %v518, %v514
    %v615 = vpack.c.b16 %v519, %v515
    %v616 = vpack.c.b16 %v520, %v516
    %v617 = vpack.c.b16 %v521, %v517
    %v618 = vpack.c.b16 %v526, %v522
    %v619 = vpack.c.b16 %v527, %v523
    %v620 = vpack.c.b16 %v528, %v524
    %v621 = vpack.c.b16 %v529, %v525
    %v622 = vpack.c.b16 %v534, %v530
    %v623 = vpack.c.b16 %v535, %v531
    %v624 = vpack.c.b16 %v536, %v532
    %v625 = vpack.c.b16 %v537, %v533
    %v626 = vpack.c.b16 %v542, %v538
    %v627 = vpack.c.b16 %v543, %v539
    %v628 = vpack.c.b16 %v544, %v540
    %v629 = vpack.c.b16 %v545, %v541
    %v630 = vpack.c.b16 %v550, %v546
    %v631 = vpack.c.b16 %v551, %v547
    %v632 = vpack.c.b16 %v552, %v548
    %v633 = vpack.c.b16 %v553, %v549
    %v634 = vpack.c.b16 %v558, %v554
    %v635 = vpack.c.b16 %v559, %v555
    %v636 = vpack.c.b16 %v560, %v556
    %v637 = vpack.c.b16 %v561, %v557
    %v638 = vpack.c.b16 %v566, %v562
    %v639 = vpack.c.b16 %v567, %v563
    %v640 = vpack.c.b16 %v568, %v564
    %v641 = vpack.c.b16 %v569, %v565
    %v642 = vpack.c.b16 %v574, %v570
    %v643 = vpack.c.b16 %v575, %v571
    %v644 = vpack.c.b16 %v576, %v572
    %v645 = vpack.c.b16 %v577, %v573
    %v646 = vpack.c.b16 %v582, %v578
    %v647 = vpack.c.b16 %v583, %v579
    %v648 = vpack.c.b16 %v584, %v580
    %v649 = vpack.c.b16 %v585, %v581
    %714 = vmatprep.subr.bf16.mxu0 %v587
    %715 = vmatpush1.bf16.msra.mxu0 %v586
    %716 = vmatprep.subr.bf16.mxu0 %v591
    %717 = vmatpush1.bf16.msra.mxu0 %v590
    %718 = vmatprep.subr.bf16.mxu0 %v595
    %719 = vmatpush1.bf16.msra.mxu0 %v594
    %720 = vmatprep.subr.bf16.mxu0 %v599
    %721 = vmatpush1.bf16.msra.mxu0 %v598
    %722 = vmatprep.subr.bf16.mxu0 %v603
    %723 = vmatpush1.bf16.msra.mxu0 %v602
    %724 = vmatprep.subr.bf16.mxu0 %v607
    %725 = vmatpush1.bf16.msra.mxu0 %v606
    %726 = vmatprep.subr.bf16.mxu0 %v611
    %727 = vmatpush1.bf16.msra.mxu0 %v610
    %728 = vmatprep.subr.bf16.mxu0 %v615
    %729 = vmatpush1.bf16.msra.mxu0 %v614
    %730 = vmatprep.subr.bf16.mxu0 %v619
    %731 = vmatpush1.bf16.msra.mxu0 %v618
    %732 = vmatprep.subr.bf16.mxu0 %v623
    %733 = vmatpush1.bf16.msra.mxu0 %v622
    %734 = vmatprep.subr.bf16.mxu0 %v627
    %735 = vmatpush1.bf16.msra.mxu0 %v626
    %736 = vmatprep.subr.bf16.mxu0 %v631
    %737 = vmatpush1.bf16.msra.mxu0 %v630
    %738 = vmatprep.subr.bf16.mxu0 %v635
    %739 = vmatpush1.bf16.msra.mxu0 %v634
    %740 = vmatprep.subr.bf16.mxu0 %v639
    %741 = vmatpush1.bf16.msra.mxu0 %v638
    %742 = vmatprep.subr.bf16.mxu0 %v643
    %743 = vmatpush1.bf16.msra.mxu0 %v642
    %744 = vmatprep.subr.bf16.mxu0 %v647
    %745 = vmatpush1.bf16.msra.mxu0 %v646
    %746 = vmatprep.mubr.bf16.mxu0 %v307
    %747 = vmatmul.mubr.bf16.gmra.mrb[0].mxu0 %v306
    %v748 = vpop.f32.mrb[0].mxu0
    %v749 = vadd.f32 %v377, %v748
    %v750 = vpop.f32.mrb[0].mxu0
    %v751 = vadd.f32 %v381, %v750
    %v752 = vpop.f32.mrb[0].mxu0
    %v753 = vpop.f32.mrb[0].mxu0
    %754 = vdwg.mxu0
    %755 = vmatprep.subr.bf16.mxu0 %v589
    %756 = vmatpush1.bf16.msra.mxu0 %v588
    %757 = vmatprep.subr.bf16.mxu0 %v593
    %758 = vmatpush1.bf16.msra.mxu0 %v592
    %759 = vmatprep.subr.bf16.mxu0 %v597
    %760 = vmatpush1.bf16.msra.mxu0 %v596
    %761 = vmatprep.subr.bf16.mxu0 %v601
    %762 = vmatpush1.bf16.msra.mxu0 %v600
    %763 = vmatprep.subr.bf16.mxu0 %v605
    %764 = vmatpush1.bf16.msra.mxu0 %v604
    %765 = vmatprep.subr.bf16.mxu0 %v609
    %766 = vmatpush1.bf16.msra.mxu0 %v608
    %767 = vmatprep.subr.bf16.mxu0 %v613
    %768 = vmatpush1.bf16.msra.mxu0 %v612
    %769 = vmatprep.subr.bf16.mxu0 %v617
    %770 = vmatpush1.bf16.msra.mxu0 %v616
    %771 = vmatprep.subr.bf16.mxu0 %v621
    %772 = vmatpush1.bf16.msra.mxu0 %v620
    %773 = vmatprep.subr.bf16.mxu0 %v625
    %774 = vmatpush1.bf16.msra.mxu0 %v624
    %775 = vmatprep.subr.bf16.mxu0 %v629
    %776 = vmatpush1.bf16.msra.mxu0 %v628
    %777 = vmatprep.subr.bf16.mxu0 %v633
    %778 = vmatpush1.bf16.msra.mxu0 %v632
    %779 = vmatprep.subr.bf16.mxu0 %v637
    %780 = vmatpush1.bf16.msra.mxu0 %v636
    %781 = vmatprep.subr.bf16.mxu0 %v641
    %782 = vmatpush1.bf16.msra.mxu0 %v640
    %783 = vmatprep.subr.bf16.mxu0 %v645
    %784 = vmatpush1.bf16.msra.mxu0 %v644
    %785 = vmatprep.subr.bf16.mxu0 %v649
    %786 = vmatpush1.bf16.msra.mxu0 %v648
    %787 = vmatprep.mubr.bf16.mxu0 %v307
    %788 = vmatmul.mubr.bf16.gmra.mrb[0].mxu0 %v306
    %v789 = vpop.f32.mrb[0].mxu0
    %v790 = vadd.f32 %v385, %v789
    %v791 = vpop.f32.mrb[0].mxu0
    %v792 = vadd.f32 %v389, %v791
    %v793 = vpop.f32.mrb[0].mxu0
    %v794 = vpop.f32.mrb[0].mxu0
    %795 = vdwg.mxu0
    %v796 = vmax.f32 %v749, 0.0
    %v797 = vmax.f32 %v751, 0.0
    %v798 = vmax.f32 %v790, 0.0
    %v799 = vmax.f32 %v792, 0.0
    %v800 = vpack.c.bf16 %v796, %v796
    %v801 = vpack.c.bf16 %v797, %v797
    %v802 = vpack.c.bf16 %v798, %v798
    %v803 = vpack.c.bf16 %v799, %v799
    %v804 = vld [vmem:[#allocation9] sm:$0xff]
    %v805 = vld [vmem:[#allocation9 + $0x8] sm:$0xff]
    %v806 = vld [vmem:[#allocation9 + $0x10] sm:$0xff]
    %v807 = vld [vmem:[#allocation9 + $0x18] sm:$0xff]
    %v808 = vld [vmem:[#allocation9 + $0x20] sm:$0xff]
    %v809 = vld [vmem:[#allocation9 + $0x28] sm:$0xff]
    %v810 = vld [vmem:[#allocation9 + $0x30] sm:$0xff]
    %v811 = vld [vmem:[#allocation9 + $0x38] sm:$0xff]
    %v812 = vld [vmem:[#allocation9 + $0x40] sm:$0xff]
    %v813 = vld [vmem:[#allocation9 + $0x48] sm:$0xff]
    %v814 = vld [vmem:[#allocation9 + $0x50] sm:$0xff]
    %v815 = vld [vmem:[#allocation9 + $0x58] sm:$0xff]
    %v816 = vld [vmem:[#allocation9 + $0x60] sm:$0xff]
    %v817 = vld [vmem:[#allocation9 + $0x68] sm:$0xff]
    %v818 = vld [vmem:[#allocation9 + $0x70] sm:$0xff]
    %v819 = vld [vmem:[#allocation9 + $0x78] sm:$0xff]
    %v820 = vld [vmem:[#allocation9 + $0x80] sm:$0xff]
    %v821 = vld [vmem:[#allocation9 + $0x88] sm:$0xff]
    %v822 = vld [vmem:[#allocation9 + $0x90] sm:$0xff]
    %v823 = vld [vmem:[#allocation9 + $0x98] sm:$0xff]
    %v824 = vld [vmem:[#allocation9 + $0xa0] sm:$0xff]
    %v825 = vld [vmem:[#allocation9 + $0xa8] sm:$0xff]
    %v826 = vld [vmem:[#allocation9 + $0xb0] sm:$0xff]
    %v827 = vld [vmem:[#allocation9 + $0xb8] sm:$0xff]
    %v828 = vld [vmem:[#allocation9 + $0xc0] sm:$0xff]
    %v829 = vld [vmem:[#allocation9 + $0xc8] sm:$0xff]
    %v830 = vld [vmem:[#allocation9 + $0xd0] sm:$0xff]
    %v831 = vld [vmem:[#allocation9 + $0xd8] sm:$0xff]
    %v832 = vld [vmem:[#allocation9 + $0xe0] sm:$0xff]
    %v833 = vld [vmem:[#allocation9 + $0xe8] sm:$0xff]
    %v834 = vld [vmem:[#allocation9 + $0xf0] sm:$0xff]
    %v835 = vld [vmem:[#allocation9 + $0xf8] sm:$0xff]
    %v836 = vld [vmem:[#allocation9 + $0x100] sm:$0xff]
    %v837 = vld [vmem:[#allocation9 + $0x108] sm:$0xff]
    %v838 = vld [vmem:[#allocation9 + $0x110] sm:$0xff]
    %v839 = vld [vmem:[#allocation9 + $0x118] sm:$0xff]
    %v840 = vld [vmem:[#allocation9 + $0x120] sm:$0xff]
    %v841 = vld [vmem:[#allocation9 + $0x128] sm:$0xff]
    %v842 = vld [vmem:[#allocation9 + $0x130] sm:$0xff]
    %v843 = vld [vmem:[#allocation9 + $0x138] sm:$0xff]
    %v844 = vld [vmem:[#allocation9 + $0x140] sm:$0xff]
    %v845 = vld [vmem:[#allocation9 + $0x148] sm:$0xff]
    %v846 = vld [vmem:[#allocation9 + $0x150] sm:$0xff]
    %v847 = vld [vmem:[#allocation9 + $0x158] sm:$0xff]
    %v848 = vld [vmem:[#allocation9 + $0x160] sm:$0xff]
    %v849 = vld [vmem:[#allocation9 + $0x168] sm:$0xff]
    %v850 = vld [vmem:[#allocation9 + $0x170] sm:$0xff]
    %v851 = vld [vmem:[#allocation9 + $0x178] sm:$0xff]
    %v852 = vld [vmem:[#allocation9 + $0x180] sm:$0xff]
    %v853 = vld [vmem:[#allocation9 + $0x188] sm:$0xff]
    %v854 = vld [vmem:[#allocation9 + $0x190] sm:$0xff]
    %v855 = vld [vmem:[#allocation9 + $0x198] sm:$0xff]
    %v856 = vld [vmem:[#allocation9 + $0x1a0] sm:$0xff]
    %v857 = vld [vmem:[#allocation9 + $0x1a8] sm:$0xff]
    %v858 = vld [vmem:[#allocation9 + $0x1b0] sm:$0xff]
    %v859 = vld [vmem:[#allocation9 + $0x1b8] sm:$0xff]
    %v860 = vld [vmem:[#allocation9 + $0x1c0] sm:$0xff]
    %v861 = vld [vmem:[#allocation9 + $0x1c8] sm:$0xff]
    %v862 = vld [vmem:[#allocation9 + $0x1d0] sm:$0xff]
    %v863 = vld [vmem:[#allocation9 + $0x1d8] sm:$0xff]
    %v864 = vld [vmem:[#allocation9 + $0x1e0] sm:$0xff]
    %v865 = vld [vmem:[#allocation9 + $0x1e8] sm:$0xff]
    %v866 = vld [vmem:[#allocation9 + $0x1f0] sm:$0xff]
    %v867 = vld [vmem:[#allocation9 + $0x1f8] sm:$0xff]
    %v868 = vld [vmem:[%s8] sm:$0x3]
    %v870 = vlaneseq
    %v871 = vshrl.u32 %v870, 7
    %v872 = vsub.s32 0, %v871
    %v873 = vrot.slane %v868, %v872
    %v874 = vlaneseq
    %v875 = vshrl.u32 %v874, 7
    %v876 = vsub.s32 1, %v875
    %v877 = vrot.slane %v868, %v876
    %v944 = vunpack.c.l.b16 %v804
    %v945 = vunpack.c.h.b16 %v804
    %v946 = vunpack.c.l.b16 %v805
    %v947 = vunpack.c.h.b16 %v805
    %v948 = vunpack.c.l.b16 %v806
    %v949 = vunpack.c.h.b16 %v806
    %v950 = vunpack.c.l.b16 %v807
    %v951 = vunpack.c.h.b16 %v807
    %v952 = vunpack.c.l.b16 %v808
    %v953 = vunpack.c.h.b16 %v808
    %v954 = vunpack.c.l.b16 %v809
    %v955 = vunpack.c.h.b16 %v809
    %v956 = vunpack.c.l.b16 %v810
    %v957 = vunpack.c.h.b16 %v810
    %v958 = vunpack.c.l.b16 %v811
    %v959 = vunpack.c.h.b16 %v811
    %v960 = vunpack.c.l.b16 %v812
    %v961 = vunpack.c.h.b16 %v812
    %v962 = vunpack.c.l.b16 %v813
    %v963 = vunpack.c.h.b16 %v813
    %v964 = vunpack.c.l.b16 %v814
    %v965 = vunpack.c.h.b16 %v814
    %v966 = vunpack.c.l.b16 %v815
    %v967 = vunpack.c.h.b16 %v815
    %v968 = vunpack.c.l.b16 %v816
    %v969 = vunpack.c.h.b16 %v816
    %v970 = vunpack.c.l.b16 %v817
    %v971 = vunpack.c.h.b16 %v817
    %v972 = vunpack.c.l.b16 %v818
    %v973 = vunpack.c.h.b16 %v818
    %v974 = vunpack.c.l.b16 %v819
    %v975 = vunpack.c.h.b16 %v819
    %v976 = vunpack.c.l.b16 %v820
    %v977 = vunpack.c.h.b16 %v820
    %v978 = vunpack.c.l.b16 %v821
    %v979 = vunpack.c.h.b16 %v821
    %v980 = vunpack.c.l.b16 %v822
    %v981 = vunpack.c.h.b16 %v822
    %v982 = vunpack.c.l.b16 %v823
    %v983 = vunpack.c.h.b16 %v823
    %v984 = vunpack.c.l.b16 %v824
    %v985 = vunpack.c.h.b16 %v824
    %v986 = vunpack.c.l.b16 %v825
    %v987 = vunpack.c.h.b16 %v825
    %v988 = vunpack.c.l.b16 %v826
    %v989 = vunpack.c.h.b16 %v826
    %v990 = vunpack.c.l.b16 %v827
    %v991 = vunpack.c.h.b16 %v827
    %v992 = vunpack.c.l.b16 %v828
    %v993 = vunpack.c.h.b16 %v828
    %v994 = vunpack.c.l.b16 %v829
    %v995 = vunpack.c.h.b16 %v829
    %v996 = vunpack.c.l.b16 %v830
    %v997 = vunpack.c.h.b16 %v830
    %v998 = vunpack.c.l.b16 %v831
    %v999 = vunpack.c.h.b16 %v831
    %v1000 = vunpack.c.l.b16 %v832
    %v1001 = vunpack.c.h.b16 %v832
    %v1002 = vunpack.c.l.b16 %v833
    %v1003 = vunpack.c.h.b16 %v833
    %v1004 = vunpack.c.l.b16 %v834
    %v1005 = vunpack.c.h.b16 %v834
    %v1006 = vunpack.c.l.b16 %v835
    %v1007 = vunpack.c.h.b16 %v835
    %v1008 = vunpack.c.l.b16 %v836
    %v1009 = vunpack.c.h.b16 %v836
    %v1010 = vunpack.c.l.b16 %v837
    %v1011 = vunpack.c.h.b16 %v837
    %v1012 = vunpack.c.l.b16 %v838
    %v1013 = vunpack.c.h.b16 %v838
    %v1014 = vunpack.c.l.b16 %v839
    %v1015 = vunpack.c.h.b16 %v839
    %v1016 = vunpack.c.l.b16 %v840
    %v1017 = vunpack.c.h.b16 %v840
    %v1018 = vunpack.c.l.b16 %v841
    %v1019 = vunpack.c.h.b16 %v841
    %v1020 = vunpack.c.l.b16 %v842
    %v1021 = vunpack.c.h.b16 %v842
    %v1022 = vunpack.c.l.b16 %v843
    %v1023 = vunpack.c.h.b16 %v843
    %v1024 = vunpack.c.l.b16 %v844
    %v1025 = vunpack.c.h.b16 %v844
    %v1026 = vunpack.c.l.b16 %v845
    %v1027 = vunpack.c.h.b16 %v845
    %v1028 = vunpack.c.l.b16 %v846
    %v1029 = vunpack.c.h.b16 %v846
    %v1030 = vunpack.c.l.b16 %v847
    %v1031 = vunpack.c.h.b16 %v847
    %v1032 = vunpack.c.l.b16 %v848
    %v1033 = vunpack.c.h.b16 %v848
    %v1034 = vunpack.c.l.b16 %v849
    %v1035 = vunpack.c.h.b16 %v849
    %v1036 = vunpack.c.l.b16 %v850
    %v1037 = vunpack.c.h.b16 %v850
    %v1038 = vunpack.c.l.b16 %v851
    %v1039 = vunpack.c.h.b16 %v851
    %v1040 = vunpack.c.l.b16 %v852
    %v1041 = vunpack.c.h.b16 %v852
    %v1042 = vunpack.c.l.b16 %v853
    %v1043 = vunpack.c.h.b16 %v853
    %v1044 = vunpack.c.l.b16 %v854
    %v1045 = vunpack.c.h.b16 %v854
    %v1046 = vunpack.c.l.b16 %v855
    %v1047 = vunpack.c.h.b16 %v855
    %v1048 = vunpack.c.l.b16 %v856
    %v1049 = vunpack.c.h.b16 %v856
    %v1050 = vunpack.c.l.b16 %v857
    %v1051 = vunpack.c.h.b16 %v857
    %v1052 = vunpack.c.l.b16 %v858
    %v1053 = vunpack.c.h.b16 %v858
    %v1054 = vunpack.c.l.b16 %v859
    %v1055 = vunpack.c.h.b16 %v859
    %v1056 = vunpack.c.l.b16 %v860
    %v1057 = vunpack.c.h.b16 %v860
    %v1058 = vunpack.c.l.b16 %v861
    %v1059 = vunpack.c.h.b16 %v861
    %v1060 = vunpack.c.l.b16 %v862
    %v1061 = vunpack.c.h.b16 %v862
    %v1062 = vunpack.c.l.b16 %v863
    %v1063 = vunpack.c.h.b16 %v863
    %v1064 = vunpack.c.l.b16 %v864
    %v1065 = vunpack.c.h.b16 %v864
    %v1066 = vunpack.c.l.b16 %v865
    %v1067 = vunpack.c.h.b16 %v865
    %v1068 = vunpack.c.l.b16 %v866
    %v1069 = vunpack.c.h.b16 %v866
    %v1070 = vunpack.c.l.b16 %v867
    %v1071 = vunpack.c.h.b16 %v867
    %v1072 = vpack.c.b16 %v946, %v944
    %v1073 = vpack.c.b16 %v947, %v945
    %v1074 = vpack.c.b16 %v950, %v948
    %v1075 = vpack.c.b16 %v951, %v949
    %v1076 = vpack.c.b16 %v954, %v952
    %v1077 = vpack.c.b16 %v955, %v953
    %v1078 = vpack.c.b16 %v958, %v956
    %v1079 = vpack.c.b16 %v959, %v957
    %v1080 = vpack.c.b16 %v962, %v960
    %v1081 = vpack.c.b16 %v963, %v961
    %v1082 = vpack.c.b16 %v966, %v964
    %v1083 = vpack.c.b16 %v967, %v965
    %v1084 = vpack.c.b16 %v970, %v968
    %v1085 = vpack.c.b16 %v971, %v969
    %v1086 = vpack.c.b16 %v974, %v972
    %v1087 = vpack.c.b16 %v975, %v973
    %v1088 = vpack.c.b16 %v978, %v976
    %v1089 = vpack.c.b16 %v979, %v977
    %v1090 = vpack.c.b16 %v982, %v980
    %v1091 = vpack.c.b16 %v983, %v981
    %v1092 = vpack.c.b16 %v986, %v984
    %v1093 = vpack.c.b16 %v987, %v985
    %v1094 = vpack.c.b16 %v990, %v988
    %v1095 = vpack.c.b16 %v991, %v989
    %v1096 = vpack.c.b16 %v994, %v992
    %v1097 = vpack.c.b16 %v995, %v993
    %v1098 = vpack.c.b16 %v998, %v996
    %v1099 = vpack.c.b16 %v999, %v997
    %v1100 = vpack.c.b16 %v1002, %v1000
    %v1101 = vpack.c.b16 %v1003, %v1001
    %v1102 = vpack.c.b16 %v1006, %v1004
    %v1103 = vpack.c.b16 %v1007, %v1005
    %v1104 = vpack.c.b16 %v1010, %v1008
    %v1105 = vpack.c.b16 %v1011, %v1009
    %v1106 = vpack.c.b16 %v1014, %v1012
    %v1107 = vpack.c.b16 %v1015, %v1013
    %v1108 = vpack.c.b16 %v1018, %v1016
    %v1109 = vpack.c.b16 %v1019, %v1017
    %v1110 = vpack.c.b16 %v1022, %v1020
    %v1111 = vpack.c.b16 %v1023, %v1021
    %v1112 = vpack.c.b16 %v1026, %v1024
    %v1113 = vpack.c.b16 %v1027, %v1025
    %v1114 = vpack.c.b16 %v1030, %v1028
    %v1115 = vpack.c.b16 %v1031, %v1029
    %v1116 = vpack.c.b16 %v1034, %v1032
    %v1117 = vpack.c.b16 %v1035, %v1033
    %v1118 = vpack.c.b16 %v1038, %v1036
    %v1119 = vpack.c.b16 %v1039, %v1037
    %v1120 = vpack.c.b16 %v1042, %v1040
    %v1121 = vpack.c.b16 %v1043, %v1041
    %v1122 = vpack.c.b16 %v1046, %v1044
    %v1123 = vpack.c.b16 %v1047, %v1045
    %v1124 = vpack.c.b16 %v1050, %v1048
    %v1125 = vpack.c.b16 %v1051, %v1049
    %v1126 = vpack.c.b16 %v1054, %v1052
    %v1127 = vpack.c.b16 %v1055, %v1053
    %v1128 = vpack.c.b16 %v1058, %v1056
    %v1129 = vpack.c.b16 %v1059, %v1057
    %v1130 = vpack.c.b16 %v1062, %v1060
    %v1131 = vpack.c.b16 %v1063, %v1061
    %v1132 = vpack.c.b16 %v1066, %v1064
    %v1133 = vpack.c.b16 %v1067, %v1065
    %v1134 = vpack.c.b16 %v1070, %v1068
    %v1135 = vpack.c.b16 %v1071, %v1069
    %1200 = vmatprep.subr.bf16.mxu0 %v1073
    %1201 = vmatpush1.bf16.msra.mxu0 %v1072
    %1202 = vmatprep.subr.bf16.mxu0 %v1075
    %1203 = vmatpush1.bf16.msra.mxu0 %v1074
    %1204 = vmatprep.subr.bf16.mxu0 %v1077
    %1205 = vmatpush1.bf16.msra.mxu0 %v1076
    %1206 = vmatprep.subr.bf16.mxu0 %v1079
    %1207 = vmatpush1.bf16.msra.mxu0 %v1078
    %1208 = vmatprep.subr.bf16.mxu0 %v1081
    %1209 = vmatpush1.bf16.msra.mxu0 %v1080
    %1210 = vmatprep.subr.bf16.mxu0 %v1083
    %1211 = vmatpush1.bf16.msra.mxu0 %v1082
    %1212 = vmatprep.subr.bf16.mxu0 %v1085
    %1213 = vmatpush1.bf16.msra.mxu0 %v1084
    %1214 = vmatprep.subr.bf16.mxu0 %v1087
    %1215 = vmatpush1.bf16.msra.mxu0 %v1086
    %1216 = vmatprep.subr.bf16.mxu0 %v1089
    %1217 = vmatpush1.bf16.msra.mxu0 %v1088
    %1218 = vmatprep.subr.bf16.mxu0 %v1091
    %1219 = vmatpush1.bf16.msra.mxu0 %v1090
    %1220 = vmatprep.subr.bf16.mxu0 %v1093
    %1221 = vmatpush1.bf16.msra.mxu0 %v1092
    %1222 = vmatprep.subr.bf16.mxu0 %v1095
    %1223 = vmatpush1.bf16.msra.mxu0 %v1094
    %1224 = vmatprep.subr.bf16.mxu0 %v1097
    %1225 = vmatpush1.bf16.msra.mxu0 %v1096
    %1226 = vmatprep.subr.bf16.mxu0 %v1099
    %1227 = vmatpush1.bf16.msra.mxu0 %v1098
    %1228 = vmatprep.subr.bf16.mxu0 %v1101
    %1229 = vmatpush1.bf16.msra.mxu0 %v1100
    %1230 = vmatprep.subr.bf16.mxu0 %v1103
    %1231 = vmatpush1.bf16.msra.mxu0 %v1102
    %1232 = vmatprep.mubr.bf16.mxu0 %v801
    %1233 = vmatmul.mubr.bf16.gmra.mrb[0].mxu0 %v800
    %v1234 = vpop.f32.mrb[0].mxu0
    %v1235 = vadd.f32 %v873, %v1234
    %v1236 = vpop.f32.mrb[0].mxu0
    %v1237 = vadd.f32 %v877, %v1236
    %v1238 = vpop.f32.mrb[0].mxu0
    %v1239 = vpop.f32.mrb[0].mxu0
    %1240 = vdwg.mxu0
    %1241 = vmatprep.subr.bf16.mxu0 %v1105
    %1242 = vmatpush1.bf16.msra.mxu0 %v1104
    %1243 = vmatprep.subr.bf16.mxu0 %v1107
    %1244 = vmatpush1.bf16.msra.mxu0 %v1106
    %1245 = vmatprep.subr.bf16.mxu0 %v1109
    %1246 = vmatpush1.bf16.msra.mxu0 %v1108
    %1247 = vmatprep.subr.bf16.mxu0 %v1111
    %1248 = vmatpush1.bf16.msra.mxu0 %v1110
    %1249 = vmatprep.subr.bf16.mxu0 %v1113
    %1250 = vmatpush1.bf16.msra.mxu0 %v1112
    %1251 = vmatprep.subr.bf16.mxu0 %v1115
    %1252 = vmatpush1.bf16.msra.mxu0 %v1114
    %1253 = vmatprep.subr.bf16.mxu0 %v1117
    %1254 = vmatpush1.bf16.msra.mxu0 %v1116
    %1255 = vmatprep.subr.bf16.mxu0 %v1119
    %1256 = vmatpush1.bf16.msra.mxu0 %v1118
    %1257 = vmatprep.subr.bf16.mxu0 %v1121
    %1258 = vmatpush1.bf16.msra.mxu0 %v1120
    %1259 = vmatprep.subr.bf16.mxu0 %v1123
    %1260 = vmatpush1.bf16.msra.mxu0 %v1122
    %1261 = vmatprep.subr.bf16.mxu0 %v1125
    %1262 = vmatpush1.bf16.msra.mxu0 %v1124
    %1263 = vmatprep.subr.bf16.mxu0 %v1127
    %1264 = vmatpush1.bf16.msra.mxu0 %v1126
    %1265 = vmatprep.subr.bf16.mxu0 %v1129
    %1266 = vmatpush1.bf16.msra.mxu0 %v1128
    %1267 = vmatprep.subr.bf16.mxu0 %v1131
    %1268 = vmatpush1.bf16.msra.mxu0 %v1130
    %1269 = vmatprep.subr.bf16.mxu0 %v1133
    %1270 = vmatpush1.bf16.msra.mxu0 %v1132
    %1271 = vmatprep.subr.bf16.mxu0 %v1135
    %1272 = vmatpush1.bf16.msra.mxu0 %v1134
    %1273 = vmatprep.mubr.bf16.mxu0 %v803
    %1274 = vmatmul.mubr.bf16.gmra.mrb[0].mxu0 %v802
    %v1275 = vpop.f32.mrb[0].mxu0
    %v1276 = vadd.f32 %v1235, %v1275
    %v1277 = vpop.f32.mrb[0].mxu0
    %v1278 = vadd.f32 %v1237, %v1277
    %v1279 = vpop.f32.mrb[0].mxu0
    %v1280 = vpop.f32.mrb[0].mxu0
    %1281 = vdwg.mxu0
    %v1282 = vmax.f32 %v1276, 0.0
    %v1283 = vmax.f32 %v1278, 0.0
    %v1284 = vld [vmem:[%s9] sm:$0x3]
    %v1286 = vlaneseq
    %v1287 = vshrl.u32 %v1286, 7
    %v1288 = vsub.s32 0, %v1287
    %v1289 = vrot.slane %v1284, %v1288
    %v1290 = vlaneseq
    %v1291 = vshrl.u32 %v1290, 7
    %v1292 = vsub.s32 1, %v1291
    %v1293 = vrot.slane %v1284, %v1292
    %v1296 = vmul.f32 %v1282, %v1289
    %v1297 = vmul.f32 %v1283, %v1293
    %v1298 = vadd.f32 %v1296, %v1297
    %1299 = vadd.xlane.f32.xlu0 %v1298
    %v1300 = vpop.xlane.xlu0 %1299
    %v1301 = vld [vmem:[#allocation2] sm:$0x1]
    %1303 = vset.pattern.permute.xlu0 0
    %1304 = vperm.xlu0 %1303, %v1301
    %v1305 = vpop.permute.xlu0 %1304
    %v1307 = vlaneseq
    %v1308 = vshrl.u32 %v1307, 7
    %v1309 = vsub.s32 0, %v1308
    %v1310 = vrot.slane %v1305, %v1309
    %v1311 = vadd.f32 %v1300, %v1310
    %v1313 = vlaneseq
    %v1314 = vand.u32 %v1313, 127
    %v1315 = vlaneseq
    %v1316 = vshrl.u32 %v1315, 7
    %v1317 = vsub.s32 %v1314, %v1316
    %v1318 = vrot.slane %v1311, %v1317
    %vm1320 = vcmask 57344
    %1321 = vst.msk [vmem:[#allocation11] sm:$0x1] %vm1320, %v1318
    // Predicated region
    $region62: #{tpu_custom_call.1} parent=1 // pred_check
      _
    $region63: #{tpu_custom_call.1} parent=1 // pred_check_branch
      %1323 = sbr.rel (0) target = $region65
    $region64: #{tpu_custom_call.1} parent=1 // pred_region
      %s1325 = ssub.s32 16, 16
      %1326 = vsyncadd [#allocation5], %s1325
      %s1328 = sshll.u32 [#allocation11], 4
      %s1329 = int_to_ptr.vmem [resolvable:$true] %s1328
      %1331 = dma.vmem_to_hbm [thread:$0]  %s1329, 16, %s11, [#allocation5]
    $region65: #{tpu_custom_call.1} parent=1 // pred_fallthru
      _
    // Predicated region
    $region66: #{tpu_custom_call.1} parent=1 // pred_check
      _
    $region67: #{tpu_custom_call.1} parent=1 // pred_check_branch
      %1333 = sbr.rel (0) target = $region69
    $region68: #{tpu_custom_call.1} parent=1 // pred_region
      %1334 = dma.done [#allocation5], 16
    $region69: #{tpu_custom_call.1} parent=1 // pred_fallthru
      _
    %1335 = vsyncpa [#allocation4], 1
    %1336 = vsyncpa [#allocation7], 1
    %1337 = vsyncpa [#allocation10], 1
    %1338 = vsyncpa [#allocation5], 1

// kernel: tpu_custom_call.1
$region0: #{tpu_custom_call.1}
  #allocation0 [shape = 'u32[]', space=smem, size = 0x4, offset = 0x4, fixed_abs, tag = 'smem constant byte address 0x4 - core index']
  #allocation1 [shape = 'u32[144,128]{1,0:T(1,128)}', space=vmem, size = 0x12000, scoped, tag = 'internal scratch']
  #allocation2 [shape = 'f32[1,1]{1,0:T(1,128)S(1)}', space=vmem, size = 0x200, scoped, tag = 'scoped memory for tpu_custom_call.1']
  %s0 = inlined_call_operand.hbm [shape: f32[8,8], index: 0, kind: input, shape index: {}]
  %s1 = inlined_call_operand.vmem [shape: bf16[8,128], index: 1, kind: input, shape index: {}]
  %s2 = inlined_call_operand.vmem [shape: f32[1,128], index: 2, kind: input, shape index: {}]
  %s3 = inlined_call_operand.hbm [shape: bf16[128,256], index: 3, kind: input, shape index: {}]
  %s4 = inlined_call_operand.vmem [shape: f32[1,256], index: 4, kind: input, shape index: {}]
  %s5 = inlined_call_operand.hbm [shape: bf16[256,512], index: 5, kind: input, shape index: {}]
  %s6 = inlined_call_operand.vmem [shape: f32[1,512], index: 6, kind: input, shape index: {}]
  %s7 = inlined_call_operand.hbm [shape: bf16[512,256], index: 7, kind: input, shape index: {}]
  %s8 = inlined_call_operand.vmem [shape: f32[1,256], index: 8, kind: input, shape index: {}]
  %s9 = inlined_call_operand.vmem [shape: f32[1,256], index: 9, kind: input, shape index: {}]
  %s10 = inlined_call_operand.<no memory space> [shape: f32[1,1], index: 10, kind: input, shape index: {}]
  %s11 = inlined_call_operand.hbm [shape: f32[1,1,8], index: 11, kind: output, shape index: {}]
  %s12 = sld [smem:[#allocation0]]
  $region70: #{tpu_custom_call.1} parent=0
    _
  %s14 = ssub.s32 1, %s12
  %s15 = scalar_select 0, %s14, %s12
  %v16 = vstv %s10
  %17 = vst [vmem:[#allocation2] sm:$0x1] %v16
  $region1: #{tpu_custom_call.1} parent=0
    #allocation3 [shape = 'u8[4096]{0}', space=vmem, size = 0x1000, scoped, tag = 'input window, operand 0, single buffered']
    #allocation4 [shape = 's32[1]{0}', space=sflag, size = 0x4, scoped, tag = 'scoped memory for tpu_custom_call.1']
    #allocation5 [shape = 's32[1]{0}', space=sflag, size = 0x4, scoped, tag = 'scoped memory for tpu_custom_call.1']
    #allocation6 [shape = 'u8[65536]{0}', space=vmem, size = 0x10000, scoped, tag = 'input window, operand 3, single buffered']
    #allocation7 [shape = 's32[1]{0}', space=sflag, size = 0x4, scoped, tag = 'scoped memory for tpu_custom_call.1']
    #allocation8 [shape = 'u8[262144]{0}', space=vmem, size = 0x40000, scoped, tag = 'input window, operand 5, single buffered']
    #allocation9 [shape = 'u8[262144]{0}', space=vmem, size = 0x40000, scoped, tag = 'input window, operand 7, single buffered']
    #allocation10 [shape = 's32[1]{0}', space=sflag, size = 0x4, scoped, tag = 'scoped memory for tpu_custom_call.1']
    #allocation11 [shape = 'u8[512]{0}', space=vmem, size = 0x400, scoped, tag = 'output window, operand 0, single buffered']
    %18 = vsyncpa [#allocation4], 0
    %19 = vsyncpa [#allocation7], 0
    %20 = vsyncpa [#allocation10], 0
    %21 = vsyncpa [#allocation5], 0
    // Predicated region
    $region2: #{tpu_custom_call.1} parent=1 // pred_check
      _
    $region3: #{tpu_custom_call.1} parent=1 // pred_check_branch
      %23 = sbr.rel (0) target = $region5
    $region4: #{tpu_custom_call.1} parent=1 // pred_region
      %s25 = ssub.s32 128, 128
      %26 = vsyncadd [#allocation4], %s25
      %s28 = sshll.u32 [#allocation3], 4
      %s29 = int_to_ptr.vmem [resolvable:$true] %s28
      %31 = dma.hbm_to_vmem [thread:$0]  %s0, 128, %s29, [#allocation4]
    $region5: #{tpu_custom_call.1} parent=1 // pred_fallthru
      _
    // Predicated region
    $region6: #{tpu_custom_call.1} parent=1 // pred_check
      _
    $region7: #{tpu_custom_call.1} parent=1 // pred_check_branch
      %33 = sbr.rel (0) target = $region9
    $region8: #{tpu_custom_call.1} parent=1 // pred_region
      _
    $region9: #{tpu_custom_call.1} parent=1 // pred_fallthru
      _
    // Predicated region
    $region10: #{tpu_custom_call.1} parent=1 // pred_check
      _
    $region11: #{tpu_custom_call.1} parent=1 // pred_check_branch
      %35 = sbr.rel (0) target = $region13
    $region12: #{tpu_custom_call.1} parent=1 // pred_region
      _
    $region13: #{tpu_custom_call.1} parent=1 // pred_fallthru
      _
    // Predicated region
    $region14: #{tpu_custom_call.1} parent=1 // pred_check
      _
    $region15: #{tpu_custom_call.1} parent=1 // pred_check_branch
      %37 = sbr.rel (0) target = $region17
    $region16: #{tpu_custom_call.1} parent=1 // pred_region
      %s39 = ssub.s32 2048, 2048
      %40 = vsyncadd [#allocation7], %s39
      %s41 = sshll.u32 [#allocation6], 4
      %s42 = int_to_ptr.vmem [resolvable:$true] %s41
      %47 = dma.hbm_to_vmem [thread:$0]  %s3, 2048, %s42, [#allocation7], 128, 128, 8
    $region17: #{tpu_custom_call.1} parent=1 // pred_fallthru
      _
    // Predicated region
    $region18: #{tpu_custom_call.1} parent=1 // pred_check
      _
    $region19: #{tpu_custom_call.1} parent=1 // pred_check_branch
      %49 = sbr.rel (0) target = $region21
    $region20: #{tpu_custom_call.1} parent=1 // pred_region
      _
    $region21: #{tpu_custom_call.1} parent=1 // pred_fallthru
      _
    // Predicated region
    $region22: #{tpu_custom_call.1} parent=1 // pred_check
      _
    $region23: #{tpu_custom_call.1} parent=1 // pred_check_branch
      %51 = sbr.rel (0) target = $region25
    $region24: #{tpu_custom_call.1} parent=1 // pred_region
      %s53 = ssub.s32 8192, 8192
      %54 = vsyncadd [#allocation7], %s53
      %s55 = sshll.u32 [#allocation8], 4
      %s56 = int_to_ptr.vmem [resolvable:$true] %s55
      %61 = dma.hbm_to_vmem [thread:$0]  %s5, 8192, %s56, [#allocation7], 256, 256, 16
    $region25: #{tpu_custom_call.1} parent=1 // pred_fallthru
      _
    // Predicated region
    $region26: #{tpu_custom_call.1} parent=1 // pred_check
      _
    $region27: #{tpu_custom_call.1} parent=1 // pred_check_branch
      %63 = sbr.rel (0) target = $region29
    $region28: #{tpu_custom_call.1} parent=1 // pred_region
      _
    $region29: #{tpu_custom_call.1} parent=1 // pred_fallthru
      _
    // Predicated region
    $region30: #{tpu_custom_call.1} parent=1 // pred_check
      _
    $region31: #{tpu_custom_call.1} parent=1 // pred_check_branch
      %65 = sbr.rel (0) target = $region33
    $region32: #{tpu_custom_call.1} parent=1 // pred_region
      %s67 = ssub.s32 8192, 8192
      %68 = vsyncadd [#allocation10], %s67
      %s69 = sshll.u32 [#allocation9], 4
      %s70 = int_to_ptr.vmem [resolvable:$true] %s69
      %75 = dma.hbm_to_vmem [thread:$0]  %s7, 8192, %s70, [#allocation10], 128, 128, 8
    $region33: #{tpu_custom_call.1} parent=1 // pred_fallthru
      _
    // Predicated region
    $region34: #{tpu_custom_call.1} parent=1 // pred_check
      _
    $region35: #{tpu_custom_call.1} parent=1 // pred_check_branch
      %77 = sbr.rel (0) target = $region37
    $region36: #{tpu_custom_call.1} parent=1 // pred_region
      _
    $region37: #{tpu_custom_call.1} parent=1 // pred_fallthru
      _
    // Predicated region
    $region38: #{tpu_custom_call.1} parent=1 // pred_check
      _
    $region39: #{tpu_custom_call.1} parent=1 // pred_check_branch
      %79 = sbr.rel (0) target = $region41
    $region40: #{tpu_custom_call.1} parent=1 // pred_region
      _
    $region41: #{tpu_custom_call.1} parent=1 // pred_fallthru
      _
    // Predicated region
    $region42: #{tpu_custom_call.1} parent=1 // pred_check
      _
    $region43: #{tpu_custom_call.1} parent=1 // pred_check_branch
      %81 = sbr.rel (0) target = $region45
    $region44: #{tpu_custom_call.1} parent=1 // pred_region
      _
    $region45: #{tpu_custom_call.1} parent=1 // pred_fallthru
      _
    // Predicated region
    $region46: #{tpu_custom_call.1} parent=1 // pred_check
      _
    $region47: #{tpu_custom_call.1} parent=1 // pred_check_branch
      %83 = sbr.rel (0) target = $region49
    $region48: #{tpu_custom_call.1} parent=1 // pred_region
      %84 = dma.done [#allocation4], 128
    $region49: #{tpu_custom_call.1} parent=1 // pred_fallthru
      _
    // Predicated region
    $region50: #{tpu_custom_call.1} parent=1 // pred_check
      _
    $region51: #{tpu_custom_call.1} parent=1 // pred_check_branch
      %86 = sbr.rel (0) target = $region53
    $region52: #{tpu_custom_call.1} parent=1 // pred_region
      %87 = dma.done [#allocation7], 2048
    $region53: #{tpu_custom_call.1} parent=1 // pred_fallthru
      _
    // Predicated region
    $region54: #{tpu_custom_call.1} parent=1 // pred_check
      _
    $region55: #{tpu_custom_call.1} parent=1 // pred_check_branch
      %89 = sbr.rel (0) target = $region57
    $region56: #{tpu_custom_call.1} parent=1 // pred_region
      %90 = dma.done [#allocation7], 8192
    $region57: #{tpu_custom_call.1} parent=1 // pred_fallthru
      _
    // Predicated region
    $region58: #{tpu_custom_call.1} parent=1 // pred_check
      _
    $region59: #{tpu_custom_call.1} parent=1 // pred_check_branch
      %92 = sbr.rel (0) target = $region61
    $region60: #{tpu_custom_call.1} parent=1 // pred_region
      %93 = dma.done [#allocation10], 8192
    $region61: #{tpu_custom_call.1} parent=1 // pred_fallthru
      _
    %v95 = vld [vmem:[#allocation3] sm:$0xff]
    %v96 = vpack.c.bf16 %v95, %v95
    %v97 = vld [vmem:[%s1] sm:$0xf]
    %v98 = vld [vmem:[%s2] sm:$0x1]
    %v100 = vlaneseq
    %v101 = vshrl.u32 %v100, 7
    %v102 = vsub.s32 0, %v101
    %v103 = vrot.slane %v98, %v102
    %vm105 = vcmask 64512
    %v107 = vsel %vm105, %v96, 0
    %vm109 = vcmask 1043456
    %v111 = vsel %vm109, %v97, 0
    %113 = vmatprep.subr.bf16.mxu0 0
    %114 = vmatpush1.bf16.msra.mxu0 %v111
    %115 = vmatprep.subr.bf16.mxu0 0
    %116 = vmatpush1.bf16.msra.mxu0 0
    %117 = vmatprep.subr.bf16.mxu0 0
    %118 = vmatpush1.bf16.msra.mxu0 0
    %119 = vmatprep.subr.bf16.mxu0 0
    %120 = vmatpush1.bf16.msra.mxu0 0
    %121 = vmatprep.subr.bf16.mxu0 0
    %122 = vmatpush1.bf16.msra.mxu0 0
    %123 = vmatprep.subr.bf16.mxu0 0
    %124 = vmatpush1.bf16.msra.mxu0 0
    %125 = vmatprep.subr.bf16.mxu0 0
    %126 = vmatpush1.bf16.msra.mxu0 0
    %127 = vmatprep.subr.bf16.mxu0 0
    %128 = vmatpush1.bf16.msra.mxu0 0
    %129 = vmatprep.subr.bf16.mxu0 0
    %130 = vmatpush1.bf16.msra.mxu0 0
    %131 = vmatprep.subr.bf16.mxu0 0
    %132 = vmatpush1.bf16.msra.mxu0 0
    %133 = vmatprep.subr.bf16.mxu0 0
    %134 = vmatpush1.bf16.msra.mxu0 0
    %135 = vmatprep.subr.bf16.mxu0 0
    %136 = vmatpush1.bf16.msra.mxu0 0
    %137 = vmatprep.subr.bf16.mxu0 0
    %138 = vmatpush1.bf16.msra.mxu0 0
    %139 = vmatprep.subr.bf16.mxu0 0
    %140 = vmatpush1.bf16.msra.mxu0 0
    %141 = vmatprep.subr.bf16.mxu0 0
    %142 = vmatpush1.bf16.msra.mxu0 0
    %143 = vmatprep.subr.bf16.mxu0 0
    %144 = vmatpush1.bf16.msra.mxu0 0
    %145 = vmatprep.mubr.bf16.mxu0 0
    %146 = vmatmul.mubr.bf16.gmra.mrb[0].mxu0 %v107
    %v147 = vpop.f32.mrb[0].mxu0
    %v148 = vadd.f32 %v103, %v147
    %v149 = vpop.f32.mrb[0].mxu0
    %v150 = vpop.f32.mrb[0].mxu0
    %v151 = vpop.f32.mrb[0].mxu0
    %152 = vdwg.mxu0
    %v153 = vmax.f32 %v148, 0.0
    %v154 = vpack.c.bf16 %v153, %v153
    %v155 = vld [vmem:[#allocation6] sm:$0xff]
    %v156 = vld [vmem:[#allocation6 + $0x8] sm:$0xff]
    %v157 = vld [vmem:[#allocation6 + $0x10] sm:$0xff]
    %v158 = vld [vmem:[#allocation6 + $0x18] sm:$0xff]
    %v159 = vld [vmem:[#allocation6 + $0x20] sm:$0xff]
    %v160 = vld [vmem:[#allocation6 + $0x28] sm:$0xff]
    %v161 = vld [vmem:[#allocation6 + $0x30] sm:$0xff]
    %v162 = vld [vmem:[#allocation6 + $0x38] sm:$0xff]
    %v163 = vld [vmem:[#allocation6 + $0x40] sm:$0xff]
    %v164 = vld [vmem:[#allocation6 + $0x48] sm:$0xff]
    %v165 = vld [vmem:[#allocation6 + $0x50] sm:$0xff]
    %v166 = vld [vmem:[#allocation6 + $0x58] sm:$0xff]
    %v167 = vld [vmem:[#allocation6 + $0x60] sm:$0xff]
    %v168 = vld [vmem:[#allocation6 + $0x68] sm:$0xff]
    %v169 = vld [vmem:[#allocation6 + $0x70] sm:$0xff]
    %v170 = vld [vmem:[#allocation6 + $0x78] sm:$0xff]
    %v171 = vld [vmem:[%s4] sm:$0x3]
    %v173 = vlaneseq
    %v174 = vshrl.u32 %v173, 7
    %v175 = vsub.s32 0, %v174
    %v176 = vrot.slane %v171, %v175
    %v177 = vlaneseq
    %v178 = vshrl.u32 %v177, 7
    %v179 = vsub.s32 1, %v178
    %v180 = vrot.slane %v171, %v179
    %v199 = vunpack.c.l.b16 %v155
    %v200 = vunpack.c.h.b16 %v155
    %v201 = vunpack.c.l.b16 %v156
    %v202 = vunpack.c.h.b16 %v156
    %v203 = vunpack.c.l.b16 %v157
    %v204 = vunpack.c.h.b16 %v157
    %v205 = vunpack.c.l.b16 %v158
    %v206 = vunpack.c.h.b16 %v158
    %v207 = vunpack.c.l.b16 %v159
    %v208 = vunpack.c.h.b16 %v159
    %v209 = vunpack.c.l.b16 %v160
    %v210 = vunpack.c.h.b16 %v160
    %v211 = vunpack.c.l.b16 %v161
    %v212 = vunpack.c.h.b16 %v161
    %v213 = vunpack.c.l.b16 %v162
    %v214 = vunpack.c.h.b16 %v162
    %v215 = vunpack.c.l.b16 %v163
    %v216 = vunpack.c.h.b16 %v163
    %v217 = vunpack.c.l.b16 %v164
    %v218 = vunpack.c.h.b16 %v164
    %v219 = vunpack.c.l.b16 %v165
    %v220 = vunpack.c.h.b16 %v165
    %v221 = vunpack.c.l.b16 %v166
    %v222 = vunpack.c.h.b16 %v166
    %v223 = vunpack.c.l.b16 %v167
    %v224 = vunpack.c.h.b16 %v167
    %v225 = vunpack.c.l.b16 %v168
    %v226 = vunpack.c.h.b16 %v168
    %v227 = vunpack.c.l.b16 %v169
    %v228 = vunpack.c.h.b16 %v169
    %v229 = vunpack.c.l.b16 %v170
    %v230 = vunpack.c.h.b16 %v170
    %v231 = vpack.c.b16 %v201, %v199
    %v232 = vpack.c.b16 %v202, %v200
    %v233 = vpack.c.b16 %v205, %v203
    %v234 = vpack.c.b16 %v206, %v204
    %v235 = vpack.c.b16 %v209, %v207
    %v236 = vpack.c.b16 %v210, %v208
    %v237 = vpack.c.b16 %v213, %v211
    %v238 = vpack.c.b16 %v214, %v212
    %v239 = vpack.c.b16 %v217, %v215
    %v240 = vpack.c.b16 %v218, %v216
    %v241 = vpack.c.b16 %v221, %v219
    %v242 = vpack.c.b16 %v222, %v220
    %v243 = vpack.c.b16 %v225, %v223
    %v244 = vpack.c.b16 %v226, %v224
    %v245 = vpack.c.b16 %v229, %v227
    %v246 = vpack.c.b16 %v230, %v228
    %263 = vmatprep.subr.bf16.mxu0 %v232
    %264 = vmatpush1.bf16.msra.mxu0 %v231
    %265 = vmatprep.subr.bf16.mxu0 %v234
    %266 = vmatpush1.bf16.msra.mxu0 %v233
    %267 = vmatprep.subr.bf16.mxu0 %v236
    %268 = vmatpush1.bf16.msra.mxu0 %v235
    %269 = vmatprep.subr.bf16.mxu0 %v238
    %270 = vmatpush1.bf16.msra.mxu0 %v237
    %271 = vmatprep.subr.bf16.mxu0 %v240
    %272 = vmatpush1.bf16.msra.mxu0 %v239
    %273 = vmatprep.subr.bf16.mxu0 %v242
    %274 = vmatpush1.bf16.msra.mxu0 %v241
    %275 = vmatprep.subr.bf16.mxu0 %v244
    %276 = vmatpush1.bf16.msra.mxu0 %v243
    %277 = vmatprep.subr.bf16.mxu0 %v246
    %278 = vmatpush1.bf16.msra.mxu0 %v245
    %279 = vmatprep.subr.bf16.mxu0 0
    %280 = vmatpush1.bf16.msra.mxu0 0
    %281 = vmatprep.subr.bf16.mxu0 0
    %282 = vmatpush1.bf16.msra.mxu0 0
    %283 = vmatprep.subr.bf16.mxu0 0
    %284 = vmatpush1.bf16.msra.mxu0 0
    %285 = vmatprep.subr.bf16.mxu0 0
    %286 = vmatpush1.bf16.msra.mxu0 0
    %287 = vmatprep.subr.bf16.mxu0 0
    %288 = vmatpush1.bf16.msra.mxu0 0
    %289 = vmatprep.subr.bf16.mxu0 0
    %290 = vmatpush1.bf16.msra.mxu0 0
    %291 = vmatprep.subr.bf16.mxu0 0
    %292 = vmatpush1.bf16.msra.mxu0 0
    %293 = vmatprep.subr.bf16.mxu0 0
    %294 = vmatpush1.bf16.msra.mxu0 0
    %295 = vmatprep.mubr.bf16.mxu0 0
    %296 = vmatmul.mubr.bf16.gmra.mrb[0].mxu0 %v154
    %v297 = vpop.f32.mrb[0].mxu0
    %v298 = vadd.f32 %v176, %v297
    %v299 = vpop.f32.mrb[0].mxu0
    %v300 = vadd.f32 %v180, %v299
    %v301 = vpop.f32.mrb[0].mxu0
    %v302 = vpop.f32.mrb[0].mxu0
    %303 = vdwg.mxu0
    %v304 = vmax.f32 %v298, 0.0
    %v305 = vmax.f32 %v300, 0.0
    %v306 = vpack.c.bf16 %v304, %v304
    %v307 = vpack.c.bf16 %v305, %v305
    %v308 = vld [vmem:[#allocation8] sm:$0xff]
    %v309 = vld [vmem:[#allocation8 + $0x8] sm:$0xff]
    %v310 = vld [vmem:[#allocation8 + $0x10] sm:$0xff]
    %v311 = vld [vmem:[#allocation8 + $0x18] sm:$0xff]
    %v312 = vld [vmem:[#allocation8 + $0x20] sm:$0xff]
    %v313 = vld [vmem:[#allocation8 + $0x28] sm:$0xff]
    %v314 = vld [vmem:[#allocation8 + $0x30] sm:$0xff]
    %v315 = vld [vmem:[#allocation8 + $0x38] sm:$0xff]
    %v316 = vld [vmem:[#allocation8 + $0x40] sm:$0xff]
    %v317 = vld [vmem:[#allocation8 + $0x48] sm:$0xff]
    %v318 = vld [vmem:[#allocation8 + $0x50] sm:$0xff]
    %v319 = vld [vmem:[#allocation8 + $0x58] sm:$0xff]
    %v320 = vld [vmem:[#allocation8 + $0x60] sm:$0xff]
    %v321 = vld [vmem:[#allocation8 + $0x68] sm:$0xff]
    %v322 = vld [vmem:[#allocation8 + $0x70] sm:$0xff]
    %v323 = vld [vmem:[#allocation8 + $0x78] sm:$0xff]
    %v324 = vld [vmem:[#allocation8 + $0x80] sm:$0xff]
    %v325 = vld [vmem:[#allocation8 + $0x88] sm:$0xff]
    %v326 = vld [vmem:[#allocation8 + $0x90] sm:$0xff]
    %v327 = vld [vmem:[#allocation8 + $0x98] sm:$0xff]
    %v328 = vld [vmem:[#allocation8 + $0xa0] sm:$0xff]
    %v329 = vld [vmem:[#allocation8 + $0xa8] sm:$0xff]
    %v330 = vld [vmem:[#allocation8 + $0xb0] sm:$0xff]
    %v331 = vld [vmem:[#allocation8 + $0xb8] sm:$0xff]
    %v332 = vld [vmem:[#allocation8 + $0xc0] sm:$0xff]
    %v333 = vld [vmem:[#allocation8 + $0xc8] sm:$0xff]
    %v334 = vld [vmem:[#allocation8 + $0xd0] sm:$0xff]
    %v335 = vld [vmem:[#allocation8 + $0xd8] sm:$0xff]
    %v336 = vld [vmem:[#allocation8 + $0xe0] sm:$0xff]
    %v337 = vld [vmem:[#allocation8 + $0xe8] sm:$0xff]
    %v338 = vld [vmem:[#allocation8 + $0xf0] sm:$0xff]
    %v339 = vld [vmem:[#allocation8 + $0xf8] sm:$0xff]
    %v340 = vld [vmem:[#allocation8 + $0x100] sm:$0xff]
    %v341 = vld [vmem:[#allocation8 + $0x108] sm:$0xff]
    %v342 = vld [vmem:[#allocation8 + $0x110] sm:$0xff]
    %v343 = vld [vmem:[#allocation8 + $0x118] sm:$0xff]
    %v344 = vld [vmem:[#allocation8 + $0x120] sm:$0xff]
    %v345 = vld [vmem:[#allocation8 + $0x128] sm:$0xff]
    %v346 = vld [vmem:[#allocation8 + $0x130] sm:$0xff]
    %v347 = vld [vmem:[#allocation8 + $0x138] sm:$0xff]
    %v348 = vld [vmem:[#allocation8 + $0x140] sm:$0xff]
    %v349 = vld [vmem:[#allocation8 + $0x148] sm:$0xff]
    %v350 = vld [vmem:[#allocation8 + $0x150] sm:$0xff]
    %v351 = vld [vmem:[#allocation8 + $0x158] sm:$0xff]
    %v352 = vld [vmem:[#allocation8 + $0x160] sm:$0xff]
    %v353 = vld [vmem:[#allocation8 + $0x168] sm:$0xff]
    %v354 = vld [vmem:[#allocation8 + $0x170] sm:$0xff]
    %v355 = vld [vmem:[#allocation8 + $0x178] sm:$0xff]
    %v356 = vld [vmem:[#allocation8 + $0x180] sm:$0xff]
    %v357 = vld [vmem:[#allocation8 + $0x188] sm:$0xff]
    %v358 = vld [vmem:[#allocation8 + $0x190] sm:$0xff]
    %v359 = vld [vmem:[#allocation8 + $0x198] sm:$0xff]
    %v360 = vld [vmem:[#allocation8 + $0x1a0] sm:$0xff]
    %v361 = vld [vmem:[#allocation8 + $0x1a8] sm:$0xff]
    %v362 = vld [vmem:[#allocation8 + $0x1b0] sm:$0xff]
    %v363 = vld [vmem:[#allocation8 + $0x1b8] sm:$0xff]
    %v364 = vld [vmem:[#allocation8 + $0x1c0] sm:$0xff]
    %v365 = vld [vmem:[#allocation8 + $0x1c8] sm:$0xff]
    %v366 = vld [vmem:[#allocation8 + $0x1d0] sm:$0xff]
    %v367 = vld [vmem:[#allocation8 + $0x1d8] sm:$0xff]
    %v368 = vld [vmem:[#allocation8 + $0x1e0] sm:$0xff]
    %v369 = vld [vmem:[#allocation8 + $0x1e8] sm:$0xff]
    %v370 = vld [vmem:[#allocation8 + $0x1f0] sm:$0xff]
    %v371 = vld [vmem:[#allocation8 + $0x1f8] sm:$0xff]
    %v372 = vld [vmem:[%s6] sm:$0xf]
    %v374 = vlaneseq
    %v375 = vshrl.u32 %v374, 7
    %v376 = vsub.s32 0, %v375
    %v377 = vrot.slane %v372, %v376
    %v378 = vlaneseq
    %v379 = vshrl.u32 %v378, 7
    %v380 = vsub.s32 1, %v379
    %v381 = vrot.slane %v372, %v380
    %v382 = vlaneseq
    %v383 = vshrl.u32 %v382, 7
    %v384 = vsub.s32 2, %v383
    %v385 = vrot.slane %v372, %v384
    %v386 = vlaneseq
    %v387 = vshrl.u32 %v386, 7
    %v388 = vsub.s32 3, %v387
    %v389 = vrot.slane %v372, %v388
    %v458 = vunpack.c.l.b16 %v308
    %v459 = vunpack.c.h.b16 %v308
    %v460 = vunpack.c.l.b16 %v309
    %v461 = vunpack.c.h.b16 %v309
    %v462 = vunpack.c.l.b16 %v310
    %v463 = vunpack.c.h.b16 %v310
    %v464 = vunpack.c.l.b16 %v311
    %v465 = vunpack.c.h.b16 %v311
    %v466 = vunpack.c.l.b16 %v312
    %v467 = vunpack.c.h.b16 %v312
    %v468 = vunpack.c.l.b16 %v313
    %v469 = vunpack.c.h.b16 %v313
    %v470 = vunpack.c.l.b16 %v314
    %v471 = vunpack.c.h.b16 %v314
    %v472 = vunpack.c.l.b16 %v315
    %v473 = vunpack.c.h.b16 %v315
    %v474 = vunpack.c.l.b16 %v316
    %v475 = vunpack.c.h.b16 %v316
    %v476 = vunpack.c.l.b16 %v317
    %v477 = vunpack.c.h.b16 %v317
    %v478 = vunpack.c.l.b16 %v318
    %v479 = vunpack.c.h.b16 %v318
    %v480 = vunpack.c.l.b16 %v319
    %v481 = vunpack.c.h.b16 %v319
    %v482 = vunpack.c.l.b16 %v320
    %v483 = vunpack.c.h.b16 %v320
    %v484 = vunpack.c.l.b16 %v321
    %v485 = vunpack.c.h.b16 %v321
    %v486 = vunpack.c.l.b16 %v322
    %v487 = vunpack.c.h.b16 %v322
    %v488 = vunpack.c.l.b16 %v323
    %v489 = vunpack.c.h.b16 %v323
    %v490 = vunpack.c.l.b16 %v324
    %v491 = vunpack.c.h.b16 %v324
    %v492 = vunpack.c.l.b16 %v325
    %v493 = vunpack.c.h.b16 %v325
    %v494 = vunpack.c.l.b16 %v326
    %v495 = vunpack.c.h.b16 %v326
    %v496 = vunpack.c.l.b16 %v327
    %v497 = vunpack.c.h.b16 %v327
    %v498 = vunpack.c.l.b16 %v328
    %v499 = vunpack.c.h.b16 %v328
    %v500 = vunpack.c.l.b16 %v329
    %v501 = vunpack.c.h.b16 %v329
    %v502 = vunpack.c.l.b16 %v330
    %v503 = vunpack.c.h.b16 %v330
    %v504 = vunpack.c.l.b16 %v331
    %v505 = vunpack.c.h.b16 %v331
    %v506 = vunpack.c.l.b16 %v332
    %v507 = vunpack.c.h.b16 %v332
    %v508 = vunpack.c.l.b16 %v333
    %v509 = vunpack.c.h.b16 %v333
    %v510 = vunpack.c.l.b16 %v334
    %v511 = vunpack.c.h.b16 %v334
    %v512 = vunpack.c.l.b16 %v335
    %v513 = vunpack.c.h.b16 %v335
    %v514 = vunpack.c.l.b16 %v336
    %v515 = vunpack.c.h.b16 %v336
    %v516 = vunpack.c.l.b16 %v337
    %v517 = vunpack.c.h.b16 %v337
    %v518 = vunpack.c.l.b16 %v338
    %v519 = vunpack.c.h.b16 %v338
    %v520 = vunpack.c.l.b16 %v339
    %v521 = vunpack.c.h.b16 %v339
    %v522 = vunpack.c.l.b16 %v340
    %v523 = vunpack.c.h.b16 %v340
    %v524 = vunpack.c.l.b16 %v341
    %v525 = vunpack.c.h.b16 %v341
    %v526 = vunpack.c.l.b16 %v342
    %v527 = vunpack.c.h.b16 %v342
    %v528 = vunpack.c.l.b16 %v343
    %v529 = vunpack.c.h.b16 %v343
    %v530 = vunpack.c.l.b16 %v344
    %v531 = vunpack.c.h.b16 %v344
    %v532 = vunpack.c.l.b16 %v345
    %v533 = vunpack.c.h.b16 %v345
    %v534 = vunpack.c.l.b16 %v346
    %v535 = vunpack.c.h.b16 %v346
    %v536 = vunpack.c.l.b16 %v347
    %v537 = vunpack.c.h.b16 %v347
    %v538 = vunpack.c.l.b16 %v348
    %v539 = vunpack.c.h.b16 %v348
    %v540 = vunpack.c.l.b16 %v349
    %v541 = vunpack.c.h.b16 %v349
    %v542 = vunpack.c.l.b16 %v350
    %v543 = vunpack.c.h.b16 %v350
    %v544 = vunpack.c.l.b16 %v351
    %v545 = vunpack.c.h.b16 %v351
    %v546 = vunpack.c.l.b16 %v352
    %v547 = vunpack.c.h.b16 %v352
    %v548 = vunpack.c.l.b16 %v353
    %v549 = vunpack.c.h.b16 %v353
    %v550 = vunpack.c.l.b16 %v354
    %v551 = vunpack.c.h.b16 %v354
    %v552 = vunpack.c.l.b16 %v355
    %v553 = vunpack.c.h.b16 %v355
    %v554 = vunpack.c.l.b16 %v356
    %v555 = vunpack.c.h.b16 %v356
    %v556 = vunpack.c.l.b16 %v357
    %v557 = vunpack.c.h.b16 %v357
    %v558 = vunpack.c.l.b16 %v358
    %v559 = vunpack.c.h.b16 %v358
    %v560 = vunpack.c.l.b16 %v359
    %v561 = vunpack.c.h.b16 %v359
    %v562 = vunpack.c.l.b16 %v360
    %v563 = vunpack.c.h.b16 %v360
    %v564 = vunpack.c.l.b16 %v361
    %v565 = vunpack.c.h.b16 %v361
    %v566 = vunpack.c.l.b16 %v362
    %v567 = vunpack.c.h.b16 %v362
    %v568 = vunpack.c.l.b16 %v363
    %v569 = vunpack.c.h.b16 %v363
    %v570 = vunpack.c.l.b16 %v364
    %v571 = vunpack.c.h.b16 %v364
    %v572 = vunpack.c.l.b16 %v365
    %v573 = vunpack.c.h.b16 %v365
    %v574 = vunpack.c.l.b16 %v366
    %v575 = vunpack.c.h.b16 %v366
    %v576 = vunpack.c.l.b16 %v367
    %v577 = vunpack.c.h.b16 %v367
    %v578 = vunpack.c.l.b16 %v368
    %v579 = vunpack.c.h.b16 %v368
    %v580 = vunpack.c.l.b16 %v369
    %v581 = vunpack.c.h.b16 %v369
    %v582 = vunpack.c.l.b16 %v370
    %v583 = vunpack.c.h.b16 %v370
    %v584 = vunpack.c.l.b16 %v371
    %v585 = vunpack.c.h.b16 %v371
    %v586 = vpack.c.b16 %v462, %v458
    %v587 = vpack.c.b16 %v463, %v459
    %v588 = vpack.c.b16 %v464, %v460
    %v589 = vpack.c.b16 %v465, %v461
    %v590 = vpack.c.b16 %v470, %v466
    %v591 = vpack.c.b16 %v471, %v467
    %v592 = vpack.c.b16 %v472, %v468
    %v593 = vpack.c.b16 %v473, %v469
    %v594 = vpack.c.b16 %v478, %v474
    %v595 = vpack.c.b16 %v479, %v475
    %v596 = vpack.c.b16 %v480, %v476
    %v597 = vpack.c.b16 %v481, %v477
    %v598 = vpack.c.b16 %v486, %v482
    %v599 = vpack.c.b16 %v487, %v483
    %v600 = vpack.c.b16 %v488, %v484
    %v601 = vpack.c.b16 %v489, %v485
    %v602 = vpack.c.b16 %v494, %v490
    %v603 = vpack.c.b16 %v495, %v491
    %v604 = vpack.c.b16 %v496, %v492
    %v605 = vpack.c.b16 %v497, %v493
    %v606 = vpack.c.b16 %v502, %v498
    %v607 = vpack.c.b16 %v503, %v499
    %v608 = vpack.c.b16 %v504, %v500
    %v609 = vpack.c.b16 %v505, %v501
    %v610 = vpack.c.b16 %v510, %v506
    %v611 = vpack.c.b16 %v511, %v507
    %v612 = vpack.c.b16 %v512, %v508
    %v613 = vpack.c.b16 %v513, %v509
    %v614 = vpack.c.b16 %v518, %v514
    %v615 = vpack.c.b16 %v519, %v515
    %v616 = vpack.c.b16 %v520, %v516
    %v617 = vpack.c.b16 %v521, %v517
    %v618 = vpack.c.b16 %v526, %v522
    %v619 = vpack.c.b16 %v527, %v523
    %v620 = vpack.c.b16 %v528, %v524
    %v621 = vpack.c.b16 %v529, %v525
    %v622 = vpack.c.b16 %v534, %v530
    %v623 = vpack.c.b16 %v535, %v531
    %v624 = vpack.c.b16 %v536, %v532
    %v625 = vpack.c.b16 %v537, %v533
    %v626 = vpack.c.b16 %v542, %v538
    %v627 = vpack.c.b16 %v543, %v539
    %v628 = vpack.c.b16 %v544, %v540
    %v629 = vpack.c.b16 %v545, %v541
    %v630 = vpack.c.b16 %v550, %v546
    %v631 = vpack.c.b16 %v551, %v547
    %v632 = vpack.c.b16 %v552, %v548
    %v633 = vpack.c.b16 %v553, %v549
    %v634 = vpack.c.b16 %v558, %v554
    %v635 = vpack.c.b16 %v559, %v555
    %v636 = vpack.c.b16 %v560, %v556
    %v637 = vpack.c.b16 %v561, %v557
    %v638 = vpack.c.b16 %v566, %v562
    %v639 = vpack.c.b16 %v567, %v563
    %v640 = vpack.c.b16 %v568, %v564
    %v641 = vpack.c.b16 %v569, %v565
    %v642 = vpack.c.b16 %v574, %v570
    %v643 = vpack.c.b16 %v575, %v571
    %v644 = vpack.c.b16 %v576, %v572
    %v645 = vpack.c.b16 %v577, %v573
    %v646 = vpack.c.b16 %v582, %v578
    %v647 = vpack.c.b16 %v583, %v579
    %v648 = vpack.c.b16 %v584, %v580
    %v649 = vpack.c.b16 %v585, %v581
    %714 = vmatprep.subr.bf16.mxu0 %v587
    %715 = vmatpush1.bf16.msra.mxu0 %v586
    %716 = vmatprep.subr.bf16.mxu0 %v591
    %717 = vmatpush1.bf16.msra.mxu0 %v590
    %718 = vmatprep.subr.bf16.mxu0 %v595
    %719 = vmatpush1.bf16.msra.mxu0 %v594
    %720 = vmatprep.subr.bf16.mxu0 %v599
    %721 = vmatpush1.bf16.msra.mxu0 %v598
    %722 = vmatprep.subr.bf16.mxu0 %v603
    %723 = vmatpush1.bf16.msra.mxu0 %v602
    %724 = vmatprep.subr.bf16.mxu0 %v607
    %725 = vmatpush1.bf16.msra.mxu0 %v606
    %726 = vmatprep.subr.bf16.mxu0 %v611
    %727 = vmatpush1.bf16.msra.mxu0 %v610
    %728 = vmatprep.subr.bf16.mxu0 %v615
    %729 = vmatpush1.bf16.msra.mxu0 %v614
    %730 = vmatprep.subr.bf16.mxu0 %v619
    %731 = vmatpush1.bf16.msra.mxu0 %v618
    %732 = vmatprep.subr.bf16.mxu0 %v623
    %733 = vmatpush1.bf16.msra.mxu0 %v622
    %734 = vmatprep.subr.bf16.mxu0 %v627
    %735 = vmatpush1.bf16.msra.mxu0 %v626
    %736 = vmatprep.subr.bf16.mxu0 %v631
    %737 = vmatpush1.bf16.msra.mxu0 %v630
    %738 = vmatprep.subr.bf16.mxu0 %v635
    %739 = vmatpush1.bf16.msra.mxu0 %v634
    %740 = vmatprep.subr.bf16.mxu0 %v639
    %741 = vmatpush1.bf16.msra.mxu0 %v638
    %742 = vmatprep.subr.bf16.mxu0 %v643
    %743 = vmatpush1.bf16.msra.mxu0 %v642
    %744 = vmatprep.subr.bf16.mxu0 %v647
    %745 = vmatpush1.bf16.msra.mxu0 %v646
    %746 = vmatprep.mubr.bf16.mxu0 %v307
    %747 = vmatmul.mubr.bf16.gmra.mrb[0].mxu0 %v306
    %v748 = vpop.f32.mrb[0].mxu0
    %v749 = vadd.f32 %v377, %v748
    %v750 = vpop.f32.mrb[0].mxu0
    %v751 = vadd.f32 %v381, %v750
    %v752 = vpop.f32.mrb[0].mxu0
    %v753 = vpop.f32.mrb[0].mxu0
    %754 = vdwg.mxu0
    %755 = vmatprep.subr.bf16.mxu0 %v589
    %756 = vmatpush1.bf16.msra.mxu0 %v588
    %757 = vmatprep.subr.bf16.mxu0 %v593
    %758 = vmatpush1.bf16.msra.mxu0 %v592
    %759 = vmatprep.subr.bf16.mxu0 %v597
    %760 = vmatpush1.bf16.msra.mxu0 %v596
    %761 = vmatprep.subr.bf16.mxu0 %v601
    %762 = vmatpush1.bf16.msra.mxu0 %v600
    %763 = vmatprep.subr.bf16.mxu0 %v605
    %764 = vmatpush1.bf16.msra.mxu0 %v604
    %765 = vmatprep.subr.bf16.mxu0 %v609
    %766 = vmatpush1.bf16.msra.mxu0 %v608
    %767 = vmatprep.subr.bf16.mxu0 %v613
    %768 = vmatpush1.bf16.msra.mxu0 %v612
    %769 = vmatprep.subr.bf16.mxu0 %v617
    %770 = vmatpush1.bf16.msra.mxu0 %v616
    %771 = vmatprep.subr.bf16.mxu0 %v621
    %772 = vmatpush1.bf16.msra.mxu0 %v620
    %773 = vmatprep.subr.bf16.mxu0 %v625
    %774 = vmatpush1.bf16.msra.mxu0 %v624
    %775 = vmatprep.subr.bf16.mxu0 %v629
    %776 = vmatpush1.bf16.msra.mxu0 %v628
    %777 = vmatprep.subr.bf16.mxu0 %v633
    %778 = vmatpush1.bf16.msra.mxu0 %v632
    %779 = vmatprep.subr.bf16.mxu0 %v637
    %780 = vmatpush1.bf16.msra.mxu0 %v636
    %781 = vmatprep.subr.bf16.mxu0 %v641
    %782 = vmatpush1.bf16.msra.mxu0 %v640
    %783 = vmatprep.subr.bf16.mxu0 %v645
    %784 = vmatpush1.bf16.msra.mxu0 %v644
    %785 = vmatprep.subr.bf16.mxu0 %v649
    %786 = vmatpush1.bf16.msra.mxu0 %v648
    %787 = vmatprep.mubr.bf16.mxu0 %v307
    %788 = vmatmul.mubr.bf16.gmra.mrb[0].mxu0 %v306
    %v789 = vpop.f32.mrb[0].mxu0
    %v790 = vadd.f32 %v385, %v789
    %v791 = vpop.f32.mrb[0].mxu0
    %v792 = vadd.f32 %v389, %v791
    %v793 = vpop.f32.mrb[0].mxu0
    %v794 = vpop.f32.mrb[0].mxu0
    %795 = vdwg.mxu0
    %v796 = vmax.f32 %v749, 0.0
    %v797 = vmax.f32 %v751, 0.0
    %v798 = vmax.f32 %v790, 0.0
    %v799 = vmax.f32 %v792, 0.0
    %v800 = vpack.c.bf16 %v796, %v796
    %v801 = vpack.c.bf16 %v797, %v797
    %v802 = vpack.c.bf16 %v798, %v798
    %v803 = vpack.c.bf16 %v799, %v799
    %v804 = vld [vmem:[#allocation9] sm:$0xff]
    %v805 = vld [vmem:[#allocation9 + $0x8] sm:$0xff]
    %v806 = vld [vmem:[#allocation9 + $0x10] sm:$0xff]
    %v807 = vld [vmem:[#allocation9 + $0x18] sm:$0xff]
    %v808 = vld [vmem:[#allocation9 + $0x20] sm:$0xff]
    %v809 = vld [vmem:[#allocation9 + $0x28] sm:$0xff]
    %v810 = vld [vmem:[#allocation9 + $0x30] sm:$0xff]
    %v811 = vld [vmem:[#allocation9 + $0x38] sm:$0xff]
    %v812 = vld [vmem:[#allocation9 + $0x40] sm:$0xff]
    %v813 = vld [vmem:[#allocation9 + $0x48] sm:$0xff]
    %v814 = vld [vmem:[#allocation9 + $0x50] sm:$0xff]
    %v815 = vld [vmem:[#allocation9 + $0x58] sm:$0xff]
    %v816 = vld [vmem:[#allocation9 + $0x60] sm:$0xff]
    %v817 = vld [vmem:[#allocation9 + $0x68] sm:$0xff]
    %v818 = vld [vmem:[#allocation9 + $0x70] sm:$0xff]
    %v819 = vld [vmem:[#allocation9 + $0x78] sm:$0xff]
    %v820 = vld [vmem:[#allocation9 + $0x80] sm:$0xff]
    %v821 = vld [vmem:[#allocation9 + $0x88] sm:$0xff]
    %v822 = vld [vmem:[#allocation9 + $0x90] sm:$0xff]
    %v823 = vld [vmem:[#allocation9 + $0x98] sm:$0xff]
    %v824 = vld [vmem:[#allocation9 + $0xa0] sm:$0xff]
    %v825 = vld [vmem:[#allocation9 + $0xa8] sm:$0xff]
    %v826 = vld [vmem:[#allocation9 + $0xb0] sm:$0xff]
    %v827 = vld [vmem:[#allocation9 + $0xb8] sm:$0xff]
    %v828 = vld [vmem:[#allocation9 + $0xc0] sm:$0xff]
    %v829 = vld [vmem:[#allocation9 + $0xc8] sm:$0xff]
    %v830 = vld [vmem:[#allocation9 + $0xd0] sm:$0xff]
    %v831 = vld [vmem:[#allocation9 + $0xd8] sm:$0xff]
    %v832 = vld [vmem:[#allocation9 + $0xe0] sm:$0xff]
    %v833 = vld [vmem:[#allocation9 + $0xe8] sm:$0xff]
    %v834 = vld [vmem:[#allocation9 + $0xf0] sm:$0xff]
    %v835 = vld [vmem:[#allocation9 + $0xf8] sm:$0xff]
    %v836 = vld [vmem:[#allocation9 + $0x100] sm:$0xff]
    %v837 = vld [vmem:[#allocation9 + $0x108] sm:$0xff]
    %v838 = vld [vmem:[#allocation9 + $0x110] sm:$0xff]
    %v839 = vld [vmem:[#allocation9 + $0x118] sm:$0xff]
    %v840 = vld [vmem:[#allocation9 + $0x120] sm:$0xff]
    %v841 = vld [vmem:[#allocation9 + $0x128] sm:$0xff]
    %v842 = vld [vmem:[#allocation9 + $0x130] sm:$0xff]
    %v843 = vld [vmem:[#allocation9 + $0x138] sm:$0xff]
    %v844 = vld [vmem:[#allocation9 + $0x140] sm:$0xff]
    %v845 = vld [vmem:[#allocation9 + $0x148] sm:$0xff]
    %v846 = vld [vmem:[#allocation9 + $0x150] sm:$0xff]
    %v847 = vld [vmem:[#allocation9 + $0x158] sm:$0xff]
    %v848 = vld [vmem:[#allocation9 + $0x160] sm:$0xff]
    %v849 = vld [vmem:[#allocation9 + $0x168] sm:$0xff]
    %v850 = vld [vmem:[#allocation9 + $0x170] sm:$0xff]
    %v851 = vld [vmem:[#allocation9 + $0x178] sm:$0xff]
    %v852 = vld [vmem:[#allocation9 + $0x180] sm:$0xff]
    %v853 = vld [vmem:[#allocation9 + $0x188] sm:$0xff]
    %v854 = vld [vmem:[#allocation9 + $0x190] sm:$0xff]
    %v855 = vld [vmem:[#allocation9 + $0x198] sm:$0xff]
    %v856 = vld [vmem:[#allocation9 + $0x1a0] sm:$0xff]
    %v857 = vld [vmem:[#allocation9 + $0x1a8] sm:$0xff]
    %v858 = vld [vmem:[#allocation9 + $0x1b0] sm:$0xff]
    %v859 = vld [vmem:[#allocation9 + $0x1b8] sm:$0xff]
    %v860 = vld [vmem:[#allocation9 + $0x1c0] sm:$0xff]
    %v861 = vld [vmem:[#allocation9 + $0x1c8] sm:$0xff]
    %v862 = vld [vmem:[#allocation9 + $0x1d0] sm:$0xff]
    %v863 = vld [vmem:[#allocation9 + $0x1d8] sm:$0xff]
    %v864 = vld [vmem:[#allocation9 + $0x1e0] sm:$0xff]
    %v865 = vld [vmem:[#allocation9 + $0x1e8] sm:$0xff]
    %v866 = vld [vmem:[#allocation9 + $0x1f0] sm:$0xff]
    %v867 = vld [vmem:[#allocation9 + $0x1f8] sm:$0xff]
    %v868 = vld [vmem:[%s8] sm:$0x3]
    %v870 = vlaneseq
    %v871 = vshrl.u32 %v870, 7
    %v872 = vsub.s32 0, %v871
    %v873 = vrot.slane %v868, %v872
    %v874 = vlaneseq
    %v875 = vshrl.u32 %v874, 7
    %v876 = vsub.s32 1, %v875
    %v877 = vrot.slane %v868, %v876
    %v944 = vunpack.c.l.b16 %v804
    %v945 = vunpack.c.h.b16 %v804
    %v946 = vunpack.c.l.b16 %v805
    %v947 = vunpack.c.h.b16 %v805
    %v948 = vunpack.c.l.b16 %v806
    %v949 = vunpack.c.h.b16 %v806
    %v950 = vunpack.c.l.b16 %v807
    %v951 = vunpack.c.h.b16 %v807
    %v952 = vunpack.c.l.b16 %v808
    %v953 = vunpack.c.h.b16 %v808
    %v954 = vunpack.c.l.b16 %v809
    %v955 = vunpack.c.h.b16 %v809
    %v956 = vunpack.c.l.b16 %v810
    %v957 = vunpack.c.h.b16 %v810
    %v958 = vunpack.c.l.b16 %v811
    %v959 = vunpack.c.h.b16 %v811
    %v960 = vunpack.c.l.b16 %v812
    %v961 = vunpack.c.h.b16 %v812
    %v962 = vunpack.c.l.b16 %v813
    %v963 = vunpack.c.h.b16 %v813
    %v964 = vunpack.c.l.b16 %v814
    %v965 = vunpack.c.h.b16 %v814
    %v966 = vunpack.c.l.b16 %v815
    %v967 = vunpack.c.h.b16 %v815
    %v968 = vunpack.c.l.b16 %v816
    %v969 = vunpack.c.h.b16 %v816
    %v970 = vunpack.c.l.b16 %v817
    %v971 = vunpack.c.h.b16 %v817
    %v972 = vunpack.c.l.b16 %v818
    %v973 = vunpack.c.h.b16 %v818
    %v974 = vunpack.c.l.b16 %v819
    %v975 = vunpack.c.h.b16 %v819
    %v976 = vunpack.c.l.b16 %v820
    %v977 = vunpack.c.h.b16 %v820
    %v978 = vunpack.c.l.b16 %v821
    %v979 = vunpack.c.h.b16 %v821
    %v980 = vunpack.c.l.b16 %v822
    %v981 = vunpack.c.h.b16 %v822
    %v982 = vunpack.c.l.b16 %v823
    %v983 = vunpack.c.h.b16 %v823
    %v984 = vunpack.c.l.b16 %v824
    %v985 = vunpack.c.h.b16 %v824
    %v986 = vunpack.c.l.b16 %v825
    %v987 = vunpack.c.h.b16 %v825
    %v988 = vunpack.c.l.b16 %v826
    %v989 = vunpack.c.h.b16 %v826
    %v990 = vunpack.c.l.b16 %v827
    %v991 = vunpack.c.h.b16 %v827
    %v992 = vunpack.c.l.b16 %v828
    %v993 = vunpack.c.h.b16 %v828
    %v994 = vunpack.c.l.b16 %v829
    %v995 = vunpack.c.h.b16 %v829
    %v996 = vunpack.c.l.b16 %v830
    %v997 = vunpack.c.h.b16 %v830
    %v998 = vunpack.c.l.b16 %v831
    %v999 = vunpack.c.h.b16 %v831
    %v1000 = vunpack.c.l.b16 %v832
    %v1001 = vunpack.c.h.b16 %v832
    %v1002 = vunpack.c.l.b16 %v833
    %v1003 = vunpack.c.h.b16 %v833
    %v1004 = vunpack.c.l.b16 %v834
    %v1005 = vunpack.c.h.b16 %v834
    %v1006 = vunpack.c.l.b16 %v835
    %v1007 = vunpack.c.h.b16 %v835
    %v1008 = vunpack.c.l.b16 %v836
    %v1009 = vunpack.c.h.b16 %v836
    %v1010 = vunpack.c.l.b16 %v837
    %v1011 = vunpack.c.h.b16 %v837
    %v1012 = vunpack.c.l.b16 %v838
    %v1013 = vunpack.c.h.b16 %v838
    %v1014 = vunpack.c.l.b16 %v839
    %v1015 = vunpack.c.h.b16 %v839
    %v1016 = vunpack.c.l.b16 %v840
    %v1017 = vunpack.c.h.b16 %v840
    %v1018 = vunpack.c.l.b16 %v841
    %v1019 = vunpack.c.h.b16 %v841
    %v1020 = vunpack.c.l.b16 %v842
    %v1021 = vunpack.c.h.b16 %v842
    %v1022 = vunpack.c.l.b16 %v843
    %v1023 = vunpack.c.h.b16 %v843
    %v1024 = vunpack.c.l.b16 %v844
    %v1025 = vunpack.c.h.b16 %v844
    %v1026 = vunpack.c.l.b16 %v845
    %v1027 = vunpack.c.h.b16 %v845
    %v1028 = vunpack.c.l.b16 %v846
    %v1029 = vunpack.c.h.b16 %v846
    %v1030 = vunpack.c.l.b16 %v847
    %v1031 = vunpack.c.h.b16 %v847
    %v1032 = vunpack.c.l.b16 %v848
    %v1033 = vunpack.c.h.b16 %v848
    %v1034 = vunpack.c.l.b16 %v849
    %v1035 = vunpack.c.h.b16 %v849
    %v1036 = vunpack.c.l.b16 %v850
    %v1037 = vunpack.c.h.b16 %v850
    %v1038 = vunpack.c.l.b16 %v851
    %v1039 = vunpack.c.h.b16 %v851
    %v1040 = vunpack.c.l.b16 %v852
    %v1041 = vunpack.c.h.b16 %v852
    %v1042 = vunpack.c.l.b16 %v853
    %v1043 = vunpack.c.h.b16 %v853
    %v1044 = vunpack.c.l.b16 %v854
    %v1045 = vunpack.c.h.b16 %v854
    %v1046 = vunpack.c.l.b16 %v855
    %v1047 = vunpack.c.h.b16 %v855
    %v1048 = vunpack.c.l.b16 %v856
    %v1049 = vunpack.c.h.b16 %v856
    %v1050 = vunpack.c.l.b16 %v857
    %v1051 = vunpack.c.h.b16 %v857
    %v1052 = vunpack.c.l.b16 %v858
    %v1053 = vunpack.c.h.b16 %v858
    %v1054 = vunpack.c.l.b16 %v859
    %v1055 = vunpack.c.h.b16 %v859
    %v1056 = vunpack.c.l.b16 %v860
    %v1057 = vunpack.c.h.b16 %v860
    %v1058 = vunpack.c.l.b16 %v861
    %v1059 = vunpack.c.h.b16 %v861
    %v1060 = vunpack.c.l.b16 %v862
    %v1061 = vunpack.c.h.b16 %v862
    %v1062 = vunpack.c.l.b16 %v863
    %v1063 = vunpack.c.h.b16 %v863
    %v1064 = vunpack.c.l.b16 %v864
    %v1065 = vunpack.c.h.b16 %v864
    %v1066 = vunpack.c.l.b16 %v865
    %v1067 = vunpack.c.h.b16 %v865
    %v1068 = vunpack.c.l.b16 %v866
    %v1069 = vunpack.c.h.b16 %v866
    %v1070 = vunpack.c.l.b16 %v867
    %v1071 = vunpack.c.h.b16 %v867
    %v1072 = vpack.c.b16 %v946, %v944
    %v1073 = vpack.c.b16 %v947, %v945
    %v1074 = vpack.c.b16 %v950, %v948
    %v1075 = vpack.c.b16 %v951, %v949
    %v1076 = vpack.c.b16 %v954, %v952
    %v1077 = vpack.c.b16 %v955, %v953
    %v1078 = vpack.c.b16 %v958, %v956
    %v1079 = vpack.c.b16 %v959, %v957
    %v1080 = vpack.c.b16 %v962, %v960
    %v1081 = vpack.c.b16 %v963, %v961
    %v1082 = vpack.c.b16 %v966, %v964
    %v1083 = vpack.c.b16 %v967, %v965
    %v1084 = vpack.c.b16 %v970, %v968
    %v1085 = vpack.c.b16 %v971, %v969
    %v1086 = vpack.c.b16 %v974, %v972
    %v1087 = vpack.c.b16 %v975, %v973
    %v1088 = vpack.c.b16 %v978, %v976
    %v1089 = vpack.c.b16 %v979, %v977
    %v1090 = vpack.c.b16 %v982, %v980
    %v1091 = vpack.c.b16 %v983, %v981
    %v1092 = vpack.c.b16 %v986, %v984
    %v1093 = vpack.c.b16 %v987, %v985
    %v1094 = vpack.c.b16 %v990, %v988
    %v1095 = vpack.c.b16 %v991, %v989
    %v1096 = vpack.c.b16 %v994, %v992
    %v1097 = vpack.c.b16 %v995, %v993
    %v1098 = vpack.c.b16 %v998, %v996
    %v1099 = vpack.c.b16 %v999, %v997
    %v1100 = vpack.c.b16 %v1002, %v1000
    %v1101 = vpack.c.b16 %v1003, %v1001
    %v1102 = vpack.c.b16 %v1006, %v1004
    %v1103 = vpack.c.b16 %v1007, %v1005
    %v1104 = vpack.c.b16 %v1010, %v1008
    %v1105 = vpack.c.b16 %v1011, %v1009
    %v1106 = vpack.c.b16 %v1014, %v1012
    %v1107 = vpack.c.b16 %v1015, %v1013
    %v1108 = vpack.c.b16 %v1018, %v1016
    %v1109 = vpack.c.b16 %v1019, %v1017
    %v1110 = vpack.c.b16 %v1022, %v1020
    %v1111 = vpack.c.b16 %v1023, %v1021
    %v1112 = vpack.c.b16 %v1026, %v1024
    %v1113 = vpack.c.b16 %v1027, %v1025
    %v1114 = vpack.c.b16 %v1030, %v1028
    %v1115 = vpack.c.b16 %v1031, %v1029
    %v1116 = vpack.c.b16 %v1034, %v1032
    %v1117 = vpack.c.b16 %v1035, %v1033
    %v1118 = vpack.c.b16 %v1038, %v1036
    %v1119 = vpack.c.b16 %v1039, %v1037
    %v1120 = vpack.c.b16 %v1042, %v1040
    %v1121 = vpack.c.b16 %v1043, %v1041
    %v1122 = vpack.c.b16 %v1046, %v1044
    %v1123 = vpack.c.b16 %v1047, %v1045
    %v1124 = vpack.c.b16 %v1050, %v1048
    %v1125 = vpack.c.b16 %v1051, %v1049
    %v1126 = vpack.c.b16 %v1054, %v1052
    %v1127 = vpack.c.b16 %v1055, %v1053
    %v1128 = vpack.c.b16 %v1058, %v1056
    %v1129 = vpack.c.b16 %v1059, %v1057
    %v1130 = vpack.c.b16 %v1062, %v1060
    %v1131 = vpack.c.b16 %v1063, %v1061
    %v1132 = vpack.c.b16 %v1066, %v1064
    %v1133 = vpack.c.b16 %v1067, %v1065
    %v1134 = vpack.c.b16 %v1070, %v1068
    %v1135 = vpack.c.b16 %v1071, %v1069
    %1200 = vmatprep.subr.bf16.mxu0 %v1073
    %1201 = vmatpush1.bf16.msra.mxu0 %v1072
    %1202 = vmatprep.subr.bf16.mxu0 %v1075
    %1203 = vmatpush1.bf16.msra.mxu0 %v1074
    %1204 = vmatprep.subr.bf16.mxu0 %v1077
    %1205 = vmatpush1.bf16.msra.mxu0 %v1076
    %1206 = vmatprep.subr.bf16.mxu0 %v1079
    %1207 = vmatpush1.bf16.msra.mxu0 %v1078
    %1208 = vmatprep.subr.bf16.mxu0 %v1081
    %1209 = vmatpush1.bf16.msra.mxu0 %v1080
    %1210 = vmatprep.subr.bf16.mxu0 %v1083
    %1211 = vmatpush1.bf16.msra.mxu0 %v1082
    %1212 = vmatprep.subr.bf16.mxu0 %v1085
    %1213 = vmatpush1.bf16.msra.mxu0 %v1084
    %1214 = vmatprep.subr.bf16.mxu0 %v1087
    %1215 = vmatpush1.bf16.msra.mxu0 %v1086
    %1216 = vmatprep.subr.bf16.mxu0 %v1089
    %1217 = vmatpush1.bf16.msra.mxu0 %v1088
    %1218 = vmatprep.subr.bf16.mxu0 %v1091
    %1219 = vmatpush1.bf16.msra.mxu0 %v1090
    %1220 = vmatprep.subr.bf16.mxu0 %v1093
    %1221 = vmatpush1.bf16.msra.mxu0 %v1092
    %1222 = vmatprep.subr.bf16.mxu0 %v1095
    %1223 = vmatpush1.bf16.msra.mxu0 %v1094
    %1224 = vmatprep.subr.bf16.mxu0 %v1097
    %1225 = vmatpush1.bf16.msra.mxu0 %v1096
    %1226 = vmatprep.subr.bf16.mxu0 %v1099
    %1227 = vmatpush1.bf16.msra.mxu0 %v1098
    %1228 = vmatprep.subr.bf16.mxu0 %v1101
    %1229 = vmatpush1.bf16.msra.mxu0 %v1100
    %1230 = vmatprep.subr.bf16.mxu0 %v1103
    %1231 = vmatpush1.bf16.msra.mxu0 %v1102
    %1232 = vmatprep.mubr.bf16.mxu0 %v801
    %1233 = vmatmul.mubr.bf16.gmra.mrb[0].mxu0 %v800
    %v1234 = vpop.f32.mrb[0].mxu0
    %v1235 = vadd.f32 %v873, %v1234
    %v1236 = vpop.f32.mrb[0].mxu0
    %v1237 = vadd.f32 %v877, %v1236
    %v1238 = vpop.f32.mrb[0].mxu0
    %v1239 = vpop.f32.mrb[0].mxu0
    %1240 = vdwg.mxu0
    %1241 = vmatprep.subr.bf16.mxu0 %v1105
    %1242 = vmatpush1.bf16.msra.mxu0 %v1104
    %1243 = vmatprep.subr.bf16.mxu0 %v1107
    %1244 = vmatpush1.bf16.msra.mxu0 %v1106
    %1245 = vmatprep.subr.bf16.mxu0 %v1109
    %1246 = vmatpush1.bf16.msra.mxu0 %v1108
    %1247 = vmatprep.subr.bf16.mxu0 %v1111
    %1248 = vmatpush1.bf16.msra.mxu0 %v1110
    %1249 = vmatprep.subr.bf16.mxu0 %v1113
    %1250 = vmatpush1.bf16.msra.mxu0 %v1112
    %1251 = vmatprep.subr.bf16.mxu0 %v1115
    %1252 = vmatpush1.bf16.msra.mxu0 %v1114
    %1253 = vmatprep.subr.bf16.mxu0 %v1117
    %1254 = vmatpush1.bf16.msra.mxu0 %v1116
    %1255 = vmatprep.subr.bf16.mxu0 %v1119
    %1256 = vmatpush1.bf16.msra.mxu0 %v1118
    %1257 = vmatprep.subr.bf16.mxu0 %v1121
    %1258 = vmatpush1.bf16.msra.mxu0 %v1120
    %1259 = vmatprep.subr.bf16.mxu0 %v1123
    %1260 = vmatpush1.bf16.msra.mxu0 %v1122
    %1261 = vmatprep.subr.bf16.mxu0 %v1125
    %1262 = vmatpush1.bf16.msra.mxu0 %v1124
    %1263 = vmatprep.subr.bf16.mxu0 %v1127
    %1264 = vmatpush1.bf16.msra.mxu0 %v1126
    %1265 = vmatprep.subr.bf16.mxu0 %v1129
    %1266 = vmatpush1.bf16.msra.mxu0 %v1128
    %1267 = vmatprep.subr.bf16.mxu0 %v1131
    %1268 = vmatpush1.bf16.msra.mxu0 %v1130
    %1269 = vmatprep.subr.bf16.mxu0 %v1133
    %1270 = vmatpush1.bf16.msra.mxu0 %v1132
    %1271 = vmatprep.subr.bf16.mxu0 %v1135
    %1272 = vmatpush1.bf16.msra.mxu0 %v1134
    %1273 = vmatprep.mubr.bf16.mxu0 %v803
    %1274 = vmatmul.mubr.bf16.gmra.mrb[0].mxu0 %v802
    %v1275 = vpop.f32.mrb[0].mxu0
    %v1276 = vadd.f32 %v1235, %v1275
    %v1277 = vpop.f32.mrb[0].mxu0
    %v1278 = vadd.f32 %v1237, %v1277
    %v1279 = vpop.f32.mrb[0].mxu0
    %v1280 = vpop.f32.mrb[0].mxu0
    %1281 = vdwg.mxu0
    %v1282 = vmax.f32 %v1276, 0.0
    %v1283 = vmax.f32 %v1278, 0.0
    %v1284 = vld [vmem:[%s9] sm:$0x3]
    %v1286 = vlaneseq
    %v1287 = vshrl.u32 %v1286, 7
    %v1288 = vsub.s32 0, %v1287
    %v1289 = vrot.slane %v1284, %v1288
    %v1290 = vlaneseq
    %v1291 = vshrl.u32 %v1290, 7
    %v1292 = vsub.s32 1, %v1291
    %v1293 = vrot.slane %v1284, %v1292
    %v1296 = vmul.f32 %v1282, %v1289
    %v1297 = vmul.f32 %v1283, %v1293
    %v1298 = vadd.f32 %v1296, %v1297
    %1299 = vadd.xlane.f32.xlu0 %v1298
    %v1300 = vpop.xlane.xlu0 %1299
    %v1301 = vld [vmem:[#allocation2] sm:$0x1]
    %1303 = vset.pattern.permute.xlu0 0
    %1304 = vperm.xlu0 %1303, %v1301
    %v1305 = vpop.permute.xlu0 %1304
    %v1307 = vlaneseq
    %v1308 = vshrl.u32 %v1307, 7
    %v1309 = vsub.s32 0, %v1308
    %v1310 = vrot.slane %v1305, %v1309
    %v1311 = vadd.f32 %v1300, %v1310
    %v1313 = vlaneseq
    %v1314 = vand.u32 %v1313, 127
    %v1315 = vlaneseq
    %v1316 = vshrl.u32 %v1315, 7
    %v1317 = vsub.s32 %v1314, %v1316
    %v1318 = vrot.slane %v1311, %v1317
    %vm1320 = vcmask 57344
    %1321 = vst.msk [vmem:[#allocation11] sm:$0x1] %vm1320, %v1318
    // Predicated region
    $region62: #{tpu_custom_call.1} parent=1 // pred_check
      _
    $region63: #{tpu_custom_call.1} parent=1 // pred_check_branch
      %1323 = sbr.rel (0) target = $region65
    $region64: #{tpu_custom_call.1} parent=1 // pred_region
      %s1325 = ssub.s32 16, 16
      %1326 = vsyncadd [#allocation5], %s1325
      %s1328 = sshll.u32 [#allocation11], 4
      %s1329 = int_to_ptr.vmem [resolvable:$true] %s1328
      %1331 = dma.vmem_to_hbm [thread:$0]  %s1329, 16, %s11, [#allocation5]
    $region65: #{tpu_custom_call.1} parent=1 // pred_fallthru
      _
    // Predicated region
    $region66: #{tpu_custom_call.1} parent=1 // pred_check
      _
    $region67: #{tpu_custom_call.1} parent=1 // pred_check_branch
      %1333 = sbr.rel (0) target = $region69
    $region68: #{tpu_custom_call.1} parent=1 // pred_region
      %1334 = dma.done [#allocation5], 16
    $region69: #{tpu_custom_call.1} parent=1 // pred_fallthru
      _
    %1335 = vsyncpa [#allocation4], 1
    %1336 = vsyncpa [#allocation7], 1
    %1337 = vsyncpa [#allocation10], 1
    %1338 = vsyncpa [#allocation5], 1

</llo_original>
